<compile_context>
chip_gen: v7x
topology: tpu7x:2x2x1
jax: 0.10.0
libtpu: 0.0.40
codegen_flags: <defaults>
</compile_context>

<pallas_src>
import functools

import jax
import jax.numpy as jnp
from jax.experimental import pallas as pl
from jax.experimental.pallas import tpu as pltpu


def _convblock_kernel(xk_ref, w_ref, b_ref, g_ref, bt_ref, pool_ref, o_ref, *,
                      hw, row_stride, n_taps, cg, eps, with_nonlinearity):
    # xk_ref  : (1, rows, K)     im2col'd / kw-stacked input for one batch elem
    # w_ref   : (n_taps, K, Ct)  conv weight slab(s) for this C_out tile
    # b_ref   : (1, Ct)          conv bias (folded into the GN shift below)
    # g_ref   : (1, Ct)          GroupNorm gamma
    # bt_ref  : (1, Ct)          GroupNorm beta
    # pool_ref: (Ct, Ct)         same-group indicator (diagonal block for tile)
    # o_ref   : (1, HW, Ct)      output tile

    # ---- Convolution (bias-free): accumulating MXU matmul(s). --------------
    # n_taps == 1: full 9-tap im2col -> a single K=9*Cin matmul (small Cin).
    # n_taps == 3: kh taps are aligned sublane windows of the same VMEM block;
    #              window starts 0, W, 2W are static, so no pl.multiple_of.
    acc = jnp.dot(xk_ref[0, pl.ds(0, hw), :], w_ref[0],
                  preferred_element_type=jnp.float32)
    for t in range(1, n_taps):
        acc = acc + jnp.dot(xk_ref[0, pl.ds(t * row_stride, hw), :], w_ref[t],
                            preferred_element_type=jnp.float32)

    # ---- GroupNorm statistics (f32); column sums ride the idle MXU. --------
    ones_row = jnp.ones((1, hw), jnp.float32)
    s_raw = jnp.dot(ones_row, acc, preferred_element_type=jnp.float32)        # (1,Ct)
    q_raw = jnp.dot(ones_row, acc * acc, preferred_element_type=jnp.float32)  # (1,Ct)
    # Fold the conv bias analytically:  t = acc + b  =>
    #   sum(t)   = s_raw + HW*b
    #   sum(t^2) = q_raw + 2*b*s_raw + HW*b^2
    b = b_ref[...]
    hw_f = float(hw)
    s = s_raw + hw_f * b
    q = q_raw + (2.0 * b) * s_raw + hw_f * (b * b)
    sq = jnp.concatenate([s, q], axis=0)                                      # (2,Ct)
    # One matmul pools within groups and broadcasts back to every channel.
    gsq = jnp.dot(sq, pool_ref[...], preferred_element_type=jnp.float32)
    inv_cnt = 1.0 / float(hw * cg)
    mean = gsq[0:1, :] * inv_cnt
    # Single-pass variance; clamp >= 0 guards rsqrt against cancellation.
    var = jnp.maximum(gsq[1:2, :] * inv_cnt - mean * mean, 0.0)
    inv = jax.lax.rsqrt(var + eps)

    # ---- Fused affine (bias rides the shift): 2 full-tile VALU ops. --------
    scale = inv * g_ref[...]                                                  # (1,Ct)
    shift = bt_ref[...] + (b - mean) * scale                                  # (1,Ct)
    y = acc * scale + shift

    if with_nonlinearity:
        # ELU, alpha = 1 (PyTorch default).  exp(min(y,0)) - 1 keeps the EUP
        # exp lowering; expm1 would be marginally more accurate near 0.
        y = jnp.where(y > 0, y, jnp.exp(jnp.minimum(y, 0.0)) - 1.0)

    o_ref[0] = y.astype(o_ref.dtype)


def _pick_c_tile(cout, cg):
    # Lane-dense C_out tile: multiple of 128 lanes and a whole number of groups.
    for cand in (256, 128):
        if cout % cand == 0 and cand % cg == 0:
            return cand
    return cout


def conv_block(x, weight, bias, gamma, beta, *, num_groups=32, eps=1e-5,
               with_nonlinearity=True, matmul_dtype=jnp.bfloat16,
               out_dtype=None, x_layout="NCHW", out_layout="NCHW"):
    """ConvBlock forward.

    x: (N, Cin, H, W) if x_layout == "NCHW", else (N, H, W, Cin).
    weight: (Cout, Cin, 3, 3) (PyTorch layout); bias/gamma/beta: (Cout,).
    Pass x_layout/out_layout="NHWC" and out_dtype=jnp.bfloat16 when chaining
    ConvBlocks to drop the NCHW<->NHWC transposes and halve writeback traffic.
    """
    if x_layout == "NCHW":
        x = jnp.transpose(x, (0, 2, 3, 1))                     # -> (N, H, W, Cin)
    n, h, w, cin = x.shape
    cout = weight.shape[0]
    assert cout % num_groups == 0, "GroupNorm needs C_out % num_groups == 0"
    cg = cout // num_groups
    hw = h * w
    out_dtype = x.dtype if out_dtype is None else out_dtype
    itm = jnp.dtype(matmul_dtype).itemsize

    c_tile = _pick_c_tile(cout, cg)
    n_ct = cout // c_tile

    # ---- choose conv decomposition ------------------------------------------
    # Small Cin: full 9-tap im2col in the wrapper (one K=9*Cin matmul); the 9x
    # input duplication is tiny relative to the output when Cin << Cout.
    # Large Cin: stack only the 3 kw taps on lanes (~3.4x input) and form the 3
    # kh taps in-kernel as aligned sublane windows; needs W % sublane_tile == 0.
    sublane = 16 if itm == 2 else 8
    use_full_im2col = (9 * cin <= 256) or (w % sublane != 0)

    xp = jnp.pad(x, ((0, 0), (1, 1), (1, 1), (0, 0)))          # (N, H+2, W+2, Cin)
    w_khkwio = jnp.transpose(weight, (2, 3, 1, 0))             # (3, 3, Cin, Cout)
    if use_full_im2col:
        n_taps, rows, row_stride = 1, hw, w
        k_dim = 9 * cin
        taps = [xp[:, kh:kh + h, kw:kw + w, :] for kh in range(3) for kw in range(3)]
        xk = jnp.concatenate(taps, axis=-1).reshape(n, rows, k_dim)
        w2 = w_khkwio.reshape(1, k_dim, cout)
    else:
        n_taps, rows, row_stride = 3, (h + 2) * w, w
        k_dim = 3 * cin
        taps = [xp[:, :, kw:kw + w, :] for kw in range(3)]
        xk = jnp.concatenate(taps, axis=-1).reshape(n, rows, k_dim)
        w2 = w_khkwio.reshape(3, k_dim, cout)
    xk = xk.astype(matmul_dtype)
    w2 = w2.astype(matmul_dtype)

    b2 = bias.reshape(1, cout).astype(jnp.float32)
    g2 = gamma.reshape(1, cout).astype(jnp.float32)
    bt2 = beta.reshape(1, cout).astype(jnp.float32)
    # Same-group indicator (block-diagonal); each grid step only loads the
    # (c_tile, c_tile) diagonal block for its C_out tile.
    ch = jnp.arange(cout) // cg
    pool = (ch[:, None] == ch[None, :]).astype(jnp.float32)

    kernel = functools.partial(
        _convblock_kernel, hw=hw, row_stride=row_stride, n_taps=n_taps,
        cg=cg, eps=float(eps), with_nonlinearity=with_nonlinearity)

    # ---- VMEM budget: generation-aware cap (~70% of per-core capacity). ----
    try:
        vmem_cap = int(pltpu.get_tpu_info().vmem_capacity_bytes)
    except Exception:
        vmem_cap = 64 * 1024 * 1024            # conservative (v7x per-TC)
    const_bufs = 1 if n_ct == 1 else 2
    est = (2 * rows * k_dim * itm                               # xk (double-buffered)
           + 2 * hw * c_tile * jnp.dtype(out_dtype).itemsize    # out (double-buffered)
           + const_bufs * (n_taps * k_dim * c_tile * itm        # conv weights
                           + c_tile * c_tile * 4                # pool
                           + 3 * c_tile * 4)                    # bias/gamma/beta
           + 3 * hw * c_tile * 4)                               # f32 acc / acc^2 / y
    vmem_limit = int(min(max(2 * est, 16 * 1024 * 1024), 0.7 * vmem_cap))
    # TODO(synk): if 2*est still exceeds the cap (very large H*W), add an HW
    # grid axis + two-phase GroupNorm instead of relying on the VMEM cap.

    def build(single_buffer_consts):
        const_kw = ({"pipeline_mode": pl.Buffered(1)}
                    if single_buffer_consts else {})
        in_specs = [
            pl.BlockSpec((1, rows, k_dim), lambda i, c: (i, 0, 0)),
            pl.BlockSpec((n_taps, k_dim, c_tile), lambda i, c: (0, 0, c), **const_kw),
            pl.BlockSpec((1, c_tile), lambda i, c: (0, c), **const_kw),
            pl.BlockSpec((1, c_tile), lambda i, c: (0, c), **const_kw),
            pl.BlockSpec((1, c_tile), lambda i, c: (0, c), **const_kw),
            pl.BlockSpec((c_tile, c_tile), lambda i, c: (c, c), **const_kw),
        ]
        return pl.pallas_call(
            kernel,
            out_shape=jax.ShapeDtypeStruct((n, hw, cout), out_dtype),
            grid_spec=pltpu.PrefetchScalarGridSpec(
                num_scalar_prefetch=0,
                grid=(n, n_ct),
                in_specs=in_specs,
                out_specs=pl.BlockSpec((1, hw, c_tile), lambda i, c: (i, 0, c)),
            ),
            compiler_params=pltpu.CompilerParams(
                dimension_semantics=("parallel", "parallel"),
                vmem_limit_bytes=vmem_limit),
        )

    try:
        # Single-buffer the constant operands when their block never changes.
        out = build(single_buffer_consts=(n_ct == 1))(xk, w2, b2, g2, bt2, pool)
    except Exception:
        # Fallback: default double-buffering (e.g. older JAX rejects Buffered(1)).
        out = build(single_buffer_consts=False)(xk, w2, b2, g2, bt2, pool)

    out = out.reshape(n, h, w, cout)
    if out_layout == "NCHW":
        out = jnp.transpose(out, (0, 3, 1, 2))
    return out


def conv_block_reference(x_nchw, weight, bias, gamma, beta, *, num_groups=32,
                         eps=1e-5, with_nonlinearity=True):
    """Pure-JAX reference (independent of the kernel) for validation."""
    n, cin, h, w = x_nchw.shape
    cout = weight.shape[0]
    cg = cout // num_groups
    x = jnp.transpose(x_nchw, (0, 2, 3, 1))
    w_hwio = jnp.transpose(weight, (2, 3, 1, 0))
    y = jax.lax.conv_general_dilated(
        x, w_hwio, window_strides=(1, 1), padding="SAME",
        dimension_numbers=("NHWC", "HWIO", "NHWC")) + bias.reshape(1, 1, 1, cout)
    yg = y.reshape(n, h, w, num_groups, cg)
    mean = yg.mean(axis=(1, 2, 4), keepdims=True)
    var = ((yg - mean) ** 2).mean(axis=(1, 2, 4), keepdims=True)
    yn = ((yg - mean) / jnp.sqrt(var + eps)).reshape(n, h, w, cout)
    yn = yn * gamma.reshape(1, 1, 1, cout) + beta.reshape(1, 1, 1, cout)
    if with_nonlinearity:
        yn = jnp.where(yn > 0, yn, jnp.exp(jnp.minimum(yn, 0.0)) - 1.0)
    return jnp.transpose(yn, (0, 3, 1, 2))


if __name__ == "__main__":
    # GroupNorm(32, C_out) needs C_out % 32 == 0; C_out = 128 keeps the output
    # last dim lane-dense (unmasked 128-lane stores).
    N, C_IN, H, W = 2, 4, 16, 16
    C_OUT = 128

    key = jax.random.PRNGKey(0)
    k_x, k_w, k_b, k_g, k_bt = jax.random.split(key, 5)

    x = jax.random.normal(k_x, (N, C_IN, H, W), dtype=jnp.float32)
    weight = 0.1 * jax.random.normal(k_w, (C_OUT, C_IN, 3, 3), dtype=jnp.float32)
    bias = 0.1 * jax.random.normal(k_b, (C_OUT,), dtype=jnp.float32)
    gamma = 1.0 + 0.1 * jax.random.normal(k_g, (C_OUT,), dtype=jnp.float32)
    beta = 0.1 * jax.random.normal(k_bt, (C_OUT,), dtype=jnp.float32)

    ref = conv_block_reference(x, weight, bias, gamma, beta)

    # f32-operand path: numerically faithful to the PyTorch module.
    out_f32 = jax.block_until_ready(
        conv_block(x, weight, bias, gamma, beta, matmul_dtype=jnp.float32))
    assert out_f32.shape == (N, C_OUT, H, W)
    assert jnp.allclose(out_f32, ref, atol=1e-4, rtol=1e-4), "f32 path mismatch"

    # Default performance path: bf16 matmul operands, f32 accumulation + GN math.
    out_bf16 = jax.block_until_ready(conv_block(x, weight, bias, gamma, beta))
    assert out_bf16.shape == (N, C_OUT, H, W)
    assert jnp.allclose(out_bf16, ref, atol=5e-2, rtol=5e-2), "bf16 path mismatch"

    print("KERNEL_OK")
</pallas_src>

<mosaic_0001>
module attributes {stable_mosaic.version = 11 : i64} {
  func.func @_convblock_kernel(%arg0: i32, %arg1: i32, %arg2: memref<1x256x36xf32, #tpu.memory_space<vmem>>, %arg3: memref<1x36x128xf32, #tpu.memory_space<vmem>>, %arg4: memref<1x128xf32, #tpu.memory_space<vmem>>, %arg5: memref<1x128xf32, #tpu.memory_space<vmem>>, %arg6: memref<1x128xf32, #tpu.memory_space<vmem>>, %arg7: memref<128x128xf32, #tpu.memory_space<vmem>>, %arg8: memref<1x256x128xf32, #tpu.memory_space<vmem>>) attributes {dimension_semantics = [#tpu.dimension_semantics<parallel>, #tpu.dimension_semantics<parallel>], iteration_bounds = array<i64: 2, 1>, scalar_prefetch = 0 : i64, scratch_operands = 0 : i64, tpu.core_type = #tpu.core_type<tc>, window_params = [{transform_indices = @transform_0, window_bounds = array<i64: 1, 256, 36>}, {pipeline_mode = #tpu.pipeline_mode<synchronous>, transform_indices = @transform_1, window_bounds = array<i64: 1, 36, 128>}, {pipeline_mode = #tpu.pipeline_mode<synchronous>, transform_indices = @transform_2, window_bounds = array<i64: 1, 128>}, {pipeline_mode = #tpu.pipeline_mode<synchronous>, transform_indices = @transform_3, window_bounds = array<i64: 1, 128>}, {pipeline_mode = #tpu.pipeline_mode<synchronous>, transform_indices = @transform_4, window_bounds = array<i64: 1, 128>}, {pipeline_mode = #tpu.pipeline_mode<synchronous>, transform_indices = @transform_5, window_bounds = array<i64: 128, 128>}, {transform_indices = @transform_6, window_bounds = array<i64: 1, 256, 128>}]} {
    %c0 = arith.constant 0 : index
    %c0_0 = arith.constant 0 : index
    %c0_1 = arith.constant 0 : index
    %0 = vector.load %arg2[%c0, %c0_0, %c0_1] : memref<1x256x36xf32, #tpu.memory_space<vmem>>, vector<1x256x36xf32>
    %1 = vector.shape_cast %0 : vector<1x256x36xf32> to vector<256x36xf32>
    %c0_2 = arith.constant 0 : index
    %c0_3 = arith.constant 0 : index
    %c0_4 = arith.constant 0 : index
    %2 = vector.load %arg3[%c0_2, %c0_3, %c0_4] : memref<1x36x128xf32, #tpu.memory_space<vmem>>, vector<1x36x128xf32>
    %3 = vector.shape_cast %2 : vector<1x36x128xf32> to vector<36x128xf32>
    %cst = arith.constant dense<0.000000e+00> : vector<256x128xf32>
    %4 = tpu.matmul %1, %3, %cst {dimension_numbers = #tpu.dot_dimension_numbers<[1], [0], [0], [1], [0, 0, 1, 1], [], []>} : vector<256x36xf32>, vector<36x128xf32>, vector<256x128xf32> -> vector<256x128xf32>
    %cst_5 = arith.constant 1.000000e+00 : f32
    %5 = vector.broadcast %cst_5 : f32 to vector<1x256xf32>
    %cst_6 = arith.constant dense<0.000000e+00> : vector<1x128xf32>
    %6 = tpu.matmul %5, %4, %cst_6 {dimension_numbers = #tpu.dot_dimension_numbers<[1], [0], [0], [1], [0, 0, 1, 1], [], []>} : vector<1x256xf32>, vector<256x128xf32>, vector<1x128xf32> -> vector<1x128xf32>
    %7 = arith.mulf %4, %4 : vector<256x128xf32>
    %cst_7 = arith.constant dense<0.000000e+00> : vector<1x128xf32>
    %8 = tpu.matmul %5, %7, %cst_7 {dimension_numbers = #tpu.dot_dimension_numbers<[1], [0], [0], [1], [0, 0, 1, 1], [], []>} : vector<1x256xf32>, vector<256x128xf32>, vector<1x128xf32> -> vector<1x128xf32>
    %c0_8 = arith.constant 0 : index
    %c0_9 = arith.constant 0 : index
    %9 = vector.load %arg4[%c0_8, %c0_9] : memref<1x128xf32, #tpu.memory_space<vmem>>, vector<1x128xf32>
    %cst_10 = arith.constant 2.560000e+02 : f32
    %10 = vector.broadcast %cst_10 : f32 to vector<1x128xf32>
    %11 = arith.mulf %10, %9 : vector<1x128xf32>
    %12 = arith.addf %6, %11 : vector<1x128xf32>
    %cst_11 = arith.constant 2.000000e+00 : f32
    %13 = vector.broadcast %cst_11 : f32 to vector<1x128xf32>
    %14 = arith.mulf %13, %9 : vector<1x128xf32>
    %15 = arith.mulf %14, %6 : vector<1x128xf32>
    %16 = arith.addf %8, %15 : vector<1x128xf32>
    %17 = arith.mulf %9, %9 : vector<1x128xf32>
    %cst_12 = arith.constant 2.560000e+02 : f32
    %18 = vector.broadcast %cst_12 : f32 to vector<1x128xf32>
    %19 = arith.mulf %18, %17 : vector<1x128xf32>
    %20 = arith.addf %16, %19 : vector<1x128xf32>
    %21 = tpu.concatenate %12, %20 in 0 : vector<1x128xf32>, vector<1x128xf32> -> vector<2x128xf32>
    %c0_13 = arith.constant 0 : index
    %c0_14 = arith.constant 0 : index
    %22 = vector.load %arg7[%c0_13, %c0_14] : memref<128x128xf32, #tpu.memory_space<vmem>>, vector<128x128xf32>
    %cst_15 = arith.constant dense<0.000000e+00> : vector<2x128xf32>
    %23 = tpu.matmul %21, %22, %cst_15 {dimension_numbers = #tpu.dot_dimension_numbers<[1], [0], [0], [1], [0, 0, 1, 1], [], []>} : vector<2x128xf32>, vector<128x128xf32>, vector<2x128xf32> -> vector<2x128xf32>
    %24 = vector.extract_strided_slice %23 {offsets = [0, 0], sizes = [1, 128], strides = [1, 1]} : vector<2x128xf32> to vector<1x128xf32>
    %cst_16 = arith.constant 9.765625E-4 : f32
    %25 = vector.broadcast %cst_16 : f32 to vector<1x128xf32>
    %26 = arith.mulf %24, %25 : vector<1x128xf32>
    %27 = vector.extract_strided_slice %23 {offsets = [1, 0], sizes = [1, 128], strides = [1, 1]} : vector<2x128xf32> to vector<1x128xf32>
    %cst_17 = arith.constant 9.765625E-4 : f32
    %28 = vector.broadcast %cst_17 : f32 to vector<1x128xf32>
    %29 = arith.mulf %27, %28 : vector<1x128xf32>
    %30 = arith.mulf %26, %26 : vector<1x128xf32>
    %31 = arith.subf %29, %30 : vector<1x128xf32>
    %cst_18 = arith.constant 0.000000e+00 : f32
    %32 = vector.broadcast %cst_18 : f32 to vector<1x128xf32>
    %33 = arith.maximumf %31, %32 : vector<1x128xf32>
    %cst_19 = arith.constant 9.99999974E-6 : f32
    %34 = vector.broadcast %cst_19 : f32 to vector<1x128xf32>
    %35 = arith.addf %33, %34 : vector<1x128xf32>
    %36 = math.rsqrt %35 : vector<1x128xf32>
    %c0_20 = arith.constant 0 : index
    %c0_21 = arith.constant 0 : index
    %37 = vector.load %arg5[%c0_20, %c0_21] : memref<1x128xf32, #tpu.memory_space<vmem>>, vector<1x128xf32>
    %38 = arith.mulf %36, %37 : vector<1x128xf32>
    %c0_22 = arith.constant 0 : index
    %c0_23 = arith.constant 0 : index
    %39 = vector.load %arg6[%c0_22, %c0_23] : memref<1x128xf32, #tpu.memory_space<vmem>>, vector<1x128xf32>
    %40 = arith.subf %9, %26 : vector<1x128xf32>
    %41 = arith.mulf %40, %38 : vector<1x128xf32>
    %42 = arith.addf %39, %41 : vector<1x128xf32>
    %43 = vector.broadcast %38 : vector<1x128xf32> to vector<256x128xf32>
    %44 = arith.mulf %4, %43 : vector<256x128xf32>
    %45 = vector.broadcast %42 : vector<1x128xf32> to vector<256x128xf32>
    %46 = arith.addf %44, %45 : vector<256x128xf32>
    %cst_24 = arith.constant 0.000000e+00 : f32
    %47 = vector.broadcast %cst_24 : f32 to vector<256x128xf32>
    %48 = arith.cmpf ogt, %46, %47 : vector<256x128xf32>
    %cst_25 = arith.constant 0.000000e+00 : f32
    %49 = vector.broadcast %cst_25 : f32 to vector<256x128xf32>
    %50 = arith.minimumf %46, %49 : vector<256x128xf32>
    %51 = math.exp %50 : vector<256x128xf32>
    %cst_26 = arith.constant 1.000000e+00 : f32
    %52 = vector.broadcast %cst_26 : f32 to vector<256x128xf32>
    %53 = arith.subf %51, %52 : vector<256x128xf32>
    %54 = arith.select %48, %46, %53 : vector<256x128xi1>, vector<256x128xf32>
    %c0_27 = arith.constant 0 : index
    %c0_28 = arith.constant 0 : index
    %c0_29 = arith.constant 0 : index
    %55 = vector.load %arg8[%c0_27, %c0_28, %c0_29] : memref<1x256x128xf32, #tpu.memory_space<vmem>>, vector<1x256x128xf32>
    %56 = vector.shape_cast %55 : vector<1x256x128xf32> to vector<256x128xf32>
    %57 = vector.shape_cast %54 : vector<256x128xf32> to vector<1x256x128xf32>
    tpu.vector_store %arg8[%c0_27, %c0_28, %c0_29], %57 {strides = array<i32>} : memref<1x256x128xf32, #tpu.memory_space<vmem>>, vector<1x256x128xf32>,
    return
  }
  func.func @transform_0(%arg0: i32, %arg1: i32) -> (i32, i32, i32) {
    %c0_i32 = arith.constant 0 : i32
    %c0_i32_0 = arith.constant 0 : i32
    %c0_i32_1 = arith.constant 0 : i32
    return %arg0, %c0_i32, %c0_i32_0 : i32, i32, i32
  }
  func.func @transform_1(%arg0: i32, %arg1: i32) -> (i32, i32, i32) {
    %c0_i32 = arith.constant 0 : i32
    %c0_i32_0 = arith.constant 0 : i32
    %c0_i32_1 = arith.constant 0 : i32
    return %c0_i32, %c0_i32_0, %arg1 : i32, i32, i32
  }
  func.func @transform_2(%arg0: i32, %arg1: i32) -> (i32, i32) {
    %c0_i32 = arith.constant 0 : i32
    %c0_i32_0 = arith.constant 0 : i32
    return %c0_i32, %arg1 : i32, i32
  }
  func.func @transform_3(%arg0: i32, %arg1: i32) -> (i32, i32) {
    %c0_i32 = arith.constant 0 : i32
    %c0_i32_0 = arith.constant 0 : i32
    return %c0_i32, %arg1 : i32, i32
  }
  func.func @transform_4(%arg0: i32, %arg1: i32) -> (i32, i32) {
    %c0_i32 = arith.constant 0 : i32
    %c0_i32_0 = arith.constant 0 : i32
    return %c0_i32, %arg1 : i32, i32
  }
  func.func @transform_5(%arg0: i32, %arg1: i32) -> (i32, i32) {
    %c0_i32 = arith.constant 0 : i32
    return %arg1, %arg1 : i32, i32
  }
  func.func @transform_6(%arg0: i32, %arg1: i32) -> (i32, i32, i32) {
    %c0_i32 = arith.constant 0 : i32
    %c0_i32_0 = arith.constant 0 : i32
    return %arg0, %c0_i32, %arg1 : i32, i32, i32
  }
}

module attributes {stable_mosaic.version = 11 : i64} {
  func.func @_convblock_kernel(%arg0: i32, %arg1: i32, %arg2: memref<1x256x36xf32, #tpu.memory_space<vmem>>, %arg3: memref<1x36x128xf32, #tpu.memory_space<vmem>>, %arg4: memref<1x128xf32, #tpu.memory_space<vmem>>, %arg5: memref<1x128xf32, #tpu.memory_space<vmem>>, %arg6: memref<1x128xf32, #tpu.memory_space<vmem>>, %arg7: memref<128x128xf32, #tpu.memory_space<vmem>>, %arg8: memref<1x256x128xf32, #tpu.memory_space<vmem>>) attributes {dimension_semantics = [#tpu.dimension_semantics<parallel>, #tpu.dimension_semantics<parallel>], iteration_bounds = array<i64: 2, 1>, scalar_prefetch = 0 : i64, scratch_operands = 0 : i64, tpu.core_type = #tpu.core_type<tc>, window_params = [{transform_indices = @transform_0, window_bounds = array<i64: 1, 256, 36>}, {transform_indices = @transform_1, window_bounds = array<i64: 1, 36, 128>}, {transform_indices = @transform_2, window_bounds = array<i64: 1, 128>}, {transform_indices = @transform_3, window_bounds = array<i64: 1, 128>}, {transform_indices = @transform_4, window_bounds = array<i64: 1, 128>}, {transform_indices = @transform_5, window_bounds = array<i64: 128, 128>}, {transform_indices = @transform_6, window_bounds = array<i64: 1, 256, 128>}]} {
    %c0 = arith.constant 0 : index
    %c0_0 = arith.constant 0 : index
    %c0_1 = arith.constant 0 : index
    %0 = vector.load %arg2[%c0, %c0_0, %c0_1] : memref<1x256x36xf32, #tpu.memory_space<vmem>>, vector<1x256x36xf32>
    %1 = vector.shape_cast %0 : vector<1x256x36xf32> to vector<256x36xf32>
    %c0_2 = arith.constant 0 : index
    %c0_3 = arith.constant 0 : index
    %c0_4 = arith.constant 0 : index
    %2 = vector.load %arg3[%c0_2, %c0_3, %c0_4] : memref<1x36x128xf32, #tpu.memory_space<vmem>>, vector<1x36x128xf32>
    %3 = vector.shape_cast %2 : vector<1x36x128xf32> to vector<36x128xf32>
    %cst = arith.constant dense<0.000000e+00> : vector<256x128xf32>
    %4 = tpu.matmul %1, %3, %cst {dimension_numbers = #tpu.dot_dimension_numbers<[1], [0], [0], [1], [0, 0, 1, 1], [], []>} : vector<256x36xf32>, vector<36x128xf32>, vector<256x128xf32> -> vector<256x128xf32>
    %cst_5 = arith.constant 1.000000e+00 : f32
    %5 = vector.broadcast %cst_5 : f32 to vector<1x256xf32>
    %cst_6 = arith.constant dense<0.000000e+00> : vector<1x128xf32>
    %6 = tpu.matmul %5, %4, %cst_6 {dimension_numbers = #tpu.dot_dimension_numbers<[1], [0], [0], [1], [0, 0, 1, 1], [], []>} : vector<1x256xf32>, vector<256x128xf32>, vector<1x128xf32> -> vector<1x128xf32>
    %7 = arith.mulf %4, %4 : vector<256x128xf32>
    %cst_7 = arith.constant dense<0.000000e+00> : vector<1x128xf32>
    %8 = tpu.matmul %5, %7, %cst_7 {dimension_numbers = #tpu.dot_dimension_numbers<[1], [0], [0], [1], [0, 0, 1, 1], [], []>} : vector<1x256xf32>, vector<256x128xf32>, vector<1x128xf32> -> vector<1x128xf32>
    %c0_8 = arith.constant 0 : index
    %c0_9 = arith.constant 0 : index
    %9 = vector.load %arg4[%c0_8, %c0_9] : memref<1x128xf32, #tpu.memory_space<vmem>>, vector<1x128xf32>
    %cst_10 = arith.constant 2.560000e+02 : f32
    %10 = vector.broadcast %cst_10 : f32 to vector<1x128xf32>
    %11 = arith.mulf %10, %9 : vector<1x128xf32>
    %12 = arith.addf %6, %11 : vector<1x128xf32>
    %cst_11 = arith.constant 2.000000e+00 : f32
    %13 = vector.broadcast %cst_11 : f32 to vector<1x128xf32>
    %14 = arith.mulf %13, %9 : vector<1x128xf32>
    %15 = arith.mulf %14, %6 : vector<1x128xf32>
    %16 = arith.addf %8, %15 : vector<1x128xf32>
    %17 = arith.mulf %9, %9 : vector<1x128xf32>
    %cst_12 = arith.constant 2.560000e+02 : f32
    %18 = vector.broadcast %cst_12 : f32 to vector<1x128xf32>
    %19 = arith.mulf %18, %17 : vector<1x128xf32>
    %20 = arith.addf %16, %19 : vector<1x128xf32>
    %21 = tpu.concatenate %12, %20 in 0 : vector<1x128xf32>, vector<1x128xf32> -> vector<2x128xf32>
    %c0_13 = arith.constant 0 : index
    %c0_14 = arith.constant 0 : index
    %22 = vector.load %arg7[%c0_13, %c0_14] : memref<128x128xf32, #tpu.memory_space<vmem>>, vector<128x128xf32>
    %cst_15 = arith.constant dense<0.000000e+00> : vector<2x128xf32>
    %23 = tpu.matmul %21, %22, %cst_15 {dimension_numbers = #tpu.dot_dimension_numbers<[1], [0], [0], [1], [0, 0, 1, 1], [], []>} : vector<2x128xf32>, vector<128x128xf32>, vector<2x128xf32> -> vector<2x128xf32>
    %24 = vector.extract_strided_slice %23 {offsets = [0, 0], sizes = [1, 128], strides = [1, 1]} : vector<2x128xf32> to vector<1x128xf32>
    %cst_16 = arith.constant 9.765625E-4 : f32
    %25 = vector.broadcast %cst_16 : f32 to vector<1x128xf32>
    %26 = arith.mulf %24, %25 : vector<1x128xf32>
    %27 = vector.extract_strided_slice %23 {offsets = [1, 0], sizes = [1, 128], strides = [1, 1]} : vector<2x128xf32> to vector<1x128xf32>
    %cst_17 = arith.constant 9.765625E-4 : f32
    %28 = vector.broadcast %cst_17 : f32 to vector<1x128xf32>
    %29 = arith.mulf %27, %28 : vector<1x128xf32>
    %30 = arith.mulf %26, %26 : vector<1x128xf32>
    %31 = arith.subf %29, %30 : vector<1x128xf32>
    %cst_18 = arith.constant 0.000000e+00 : f32
    %32 = vector.broadcast %cst_18 : f32 to vector<1x128xf32>
    %33 = arith.maximumf %31, %32 : vector<1x128xf32>
    %cst_19 = arith.constant 9.99999974E-6 : f32
    %34 = vector.broadcast %cst_19 : f32 to vector<1x128xf32>
    %35 = arith.addf %33, %34 : vector<1x128xf32>
    %36 = math.rsqrt %35 : vector<1x128xf32>
    %c0_20 = arith.constant 0 : index
    %c0_21 = arith.constant 0 : index
    %37 = vector.load %arg5[%c0_20, %c0_21] : memref<1x128xf32, #tpu.memory_space<vmem>>, vector<1x128xf32>
    %38 = arith.mulf %36, %37 : vector<1x128xf32>
    %c0_22 = arith.constant 0 : index
    %c0_23 = arith.constant 0 : index
    %39 = vector.load %arg6[%c0_22, %c0_23] : memref<1x128xf32, #tpu.memory_space<vmem>>, vector<1x128xf32>
    %40 = arith.subf %9, %26 : vector<1x128xf32>
    %41 = arith.mulf %40, %38 : vector<1x128xf32>
    %42 = arith.addf %39, %41 : vector<1x128xf32>
    %43 = vector.broadcast %38 : vector<1x128xf32> to vector<256x128xf32>
    %44 = arith.mulf %4, %43 : vector<256x128xf32>
    %45 = vector.broadcast %42 : vector<1x128xf32> to vector<256x128xf32>
    %46 = arith.addf %44, %45 : vector<256x128xf32>
    %cst_24 = arith.constant 0.000000e+00 : f32
    %47 = vector.broadcast %cst_24 : f32 to vector<256x128xf32>
    %48 = arith.cmpf ogt, %46, %47 : vector<256x128xf32>
    %cst_25 = arith.constant 0.000000e+00 : f32
    %49 = vector.broadcast %cst_25 : f32 to vector<256x128xf32>
    %50 = arith.minimumf %46, %49 : vector<256x128xf32>
    %51 = math.exp %50 : vector<256x128xf32>
    %cst_26 = arith.constant 1.000000e+00 : f32
    %52 = vector.broadcast %cst_26 : f32 to vector<256x128xf32>
    %53 = arith.subf %51, %52 : vector<256x128xf32>
    %54 = arith.select %48, %46, %53 : vector<256x128xi1>, vector<256x128xf32>
    %c0_27 = arith.constant 0 : index
    %c0_28 = arith.constant 0 : index
    %c0_29 = arith.constant 0 : index
    %55 = vector.load %arg8[%c0_27, %c0_28, %c0_29] : memref<1x256x128xf32, #tpu.memory_space<vmem>>, vector<1x256x128xf32>
    %56 = vector.shape_cast %55 : vector<1x256x128xf32> to vector<256x128xf32>
    %57 = vector.shape_cast %54 : vector<256x128xf32> to vector<1x256x128xf32>
    tpu.vector_store %arg8[%c0_27, %c0_28, %c0_29], %57 {strides = array<i32>} : memref<1x256x128xf32, #tpu.memory_space<vmem>>, vector<1x256x128xf32>,
    return
  }
  func.func @transform_0(%arg0: i32, %arg1: i32) -> (i32, i32, i32) {
    %c0_i32 = arith.constant 0 : i32
    %c0_i32_0 = arith.constant 0 : i32
    %c0_i32_1 = arith.constant 0 : i32
    return %arg0, %c0_i32, %c0_i32_0 : i32, i32, i32
  }
  func.func @transform_1(%arg0: i32, %arg1: i32) -> (i32, i32, i32) {
    %c0_i32 = arith.constant 0 : i32
    %c0_i32_0 = arith.constant 0 : i32
    %c0_i32_1 = arith.constant 0 : i32
    return %c0_i32, %c0_i32_0, %arg1 : i32, i32, i32
  }
  func.func @transform_2(%arg0: i32, %arg1: i32) -> (i32, i32) {
    %c0_i32 = arith.constant 0 : i32
    %c0_i32_0 = arith.constant 0 : i32
    return %c0_i32, %arg1 : i32, i32
  }
  func.func @transform_3(%arg0: i32, %arg1: i32) -> (i32, i32) {
    %c0_i32 = arith.constant 0 : i32
    %c0_i32_0 = arith.constant 0 : i32
    return %c0_i32, %arg1 : i32, i32
  }
  func.func @transform_4(%arg0: i32, %arg1: i32) -> (i32, i32) {
    %c0_i32 = arith.constant 0 : i32
    %c0_i32_0 = arith.constant 0 : i32
    return %c0_i32, %arg1 : i32, i32
  }
  func.func @transform_5(%arg0: i32, %arg1: i32) -> (i32, i32) {
    %c0_i32 = arith.constant 0 : i32
    return %arg1, %arg1 : i32, i32
  }
  func.func @transform_6(%arg0: i32, %arg1: i32) -> (i32, i32, i32) {
    %c0_i32 = arith.constant 0 : i32
    %c0_i32_0 = arith.constant 0 : i32
    return %arg0, %c0_i32, %arg1 : i32, i32, i32
  }
}

</mosaic_0001>

<llo_original>
// kernel: tpu_custom_call.1
$region0: #{tpu_custom_call.1}
  #allocation0 [shape = 'u32[]', space=smem, size = 0x4, offset = 0x4, fixed_abs, tag = 'smem constant byte address 0x4 - core index']
  #allocation1 [shape = 'u32[144,128]{1,0:T(1,128)}', space=vmem, size = 0x12000, scoped, tag = 'internal scratch']
  %s0 = inlined_call_operand.vmem [shape: f32[2,256,36], index: 0, kind: input, shape index: {}]
  %s1 = inlined_call_operand.vmem [shape: f32[1,36,128], index: 1, kind: input, shape index: {}]
  %s2 = inlined_call_operand.vmem [shape: f32[1,128], index: 2, kind: input, shape index: {}]
  %s3 = inlined_call_operand.vmem [shape: f32[1,128], index: 3, kind: input, shape index: {}]
  %s4 = inlined_call_operand.vmem [shape: f32[1,128], index: 4, kind: input, shape index: {}]
  %s5 = inlined_call_operand.vmem [shape: f32[128,128], index: 5, kind: input, shape index: {}]
  %s6 = inlined_call_operand.hbm [shape: f32[2,256,128], index: 6, kind: output, shape index: {}]
  %s7 = sld [smem:[#allocation0]]
  $region57: #{tpu_custom_call.1} parent=0
    _
  %s9 = ssub.s32 1, %s7
  %s10 = scalar_select 0, %s9, %s7
  $region1: #{tpu_custom_call.1} parent=0
    #allocation2 [shape = 'u8[262144]{0}', space=vmem, size = 0x40000, scoped, tag = 'output window, operand 0']
    #allocation3 [shape = 's32[2]{0}', space=sflag, size = 0x8, scoped, tag = 'scoped memory for tpu_custom_call.1']
    %11 = vsyncpa [#allocation3], 0
    %s12 = scalar_lea.sflag [#allocation3], 1
    %13 = vsyncpa %s12, 0
    loop: start=0, step=1, limit=4
    $region2: #{tpu_custom_call.1} parent=1 // loop_pre_header
      _
    $region3: #{tpu_custom_call.1} parent=1 // loop_header
      %s15 = sphi 0, %s19
      %p16 = scmp.ge.s32.totalorder %s15, 4
      %s22 = sphi 0, %s34
      %s23 = sphi 0, %s30
      %s24 = sphi 0, %s22
      %s25 = sphi 0, %s23
      %s26 = sphi 0, %s24
      %s27 = sphi 0, %s25
      %s37 = sphi 0, %s39
      %s40 = sphi 0, %s37
      %s41 = sphi 0, %s40
      %s57 = sphi 0, %s41
      %s63 = sphi 0, %s65
      %s66 = sphi 0, %s63
      %s67 = sphi 0, %s66
      %s83 = sphi 0, %s67
      %s89 = sphi 0, %s91
      %s92 = sphi 0, %s89
      %s93 = sphi 0, %s92
      %s109 = sphi 0, %s93
      %s115 = sphi 0, %s117
      %s118 = sphi 0, %s115
      %s119 = sphi 0, %s118
      %s135 = sphi 0, %s119
      %s141 = sphi 0, %s143
      %s144 = sphi 0, %s141
      %s145 = sphi 0, %s144
      %s161 = sphi 0, %s145
      %s169 = sphi 0, %s171
      %s172 = sphi 0, %s169
      %s173 = sphi 0, %s172
      %s189 = sphi 0, %s173
      %s197 = sphi 0, %s199
      %s200 = sphi 0, %s197
      %s201 = sphi 0, %s200
      %s217 = sphi 0, %s201
    $region4: #{tpu_custom_call.1} parent=1 // loop_header_branch
      %18 = sbr.rel (%p16) target = $region8
    $region5: #{tpu_custom_call.1} parent=1 // loop_body
      %s20 = ssub.s32 %s15, 1
      %s21 = ssub.s32 %s15, 2
      %s28 = sadd.s32 1, %s23
      %p29 = scmp.ge.s32.totalorder %s28, 1
      %s30 = scalar_select %p29, 0, %s28
      %s31 = sadd.s32 1, %s22
      %s32 = scalar_select %p29, %s31, %s22
      %p33 = scmp.ge.s32.totalorder %s32, 2
      %s34 = scalar_select %p33, 0, %s32
      %s35 = ssub.s32 %s22, %s34
      %p36 = scmp.eq.s32.totalorder %s35, 0
      %s38 = sadd.s32 %s37, 1
      %s39 = scalar_select %p36, %s37, %s38
      %p42 = pneg %p36
      %p43 = scmp.eq.s32.totalorder %s15, 1
      %p44 = por %p42, %p43
      %p45 = scmp.ne.s32.totalorder %s37, %s40
      %p46 = scmp.eq.s32.totalorder %s15, 0
      %p47 = por %p45, %p46
      %p48 = scmp.ne.s32.totalorder %s37, %s40
      %p49 = scmp.eq.s32.totalorder %s20, 1
      %p50 = por %p48, %p49
      %p51 = scmp.ne.s32.totalorder %s40, %s41
      %p52 = scmp.eq.s32.totalorder %s20, 0
      %p53 = por %p51, %p52
      %p54 = scmp.ne.s32.totalorder %s40, %s41
      %p55 = scmp.eq.s32.totalorder %s21, 1
      %p56 = por %p54, %p55
      %p58 = scmp.ne.s32.totalorder %s41, %s57
      %p59 = scmp.eq.s32.totalorder %s21, 0
      %p60 = por %p58, %p59
      %s61 = ssub.s32 %s23, %s30
      %p62 = scmp.eq.s32.totalorder %s61, 0
      %s64 = sadd.s32 %s63, 1
      %s65 = scalar_select %p62, %s63, %s64
      %p68 = pneg %p62
      %p69 = scmp.eq.s32.totalorder %s15, 1
      %p70 = por %p68, %p69
      %p71 = scmp.ne.s32.totalorder %s63, %s66
      %p72 = scmp.eq.s32.totalorder %s15, 0
      %p73 = por %p71, %p72
      %p74 = scmp.ne.s32.totalorder %s63, %s66
      %p75 = scmp.eq.s32.totalorder %s20, 1
      %p76 = por %p74, %p75
      %p77 = scmp.ne.s32.totalorder %s66, %s67
      %p78 = scmp.eq.s32.totalorder %s20, 0
      %p79 = por %p77, %p78
      %p80 = scmp.ne.s32.totalorder %s66, %s67
      %p81 = scmp.eq.s32.totalorder %s21, 1
      %p82 = por %p80, %p81
      %p84 = scmp.ne.s32.totalorder %s67, %s83
      %p85 = scmp.eq.s32.totalorder %s21, 0
      %p86 = por %p84, %p85
      %s87 = ssub.s32 %s23, %s30
      %p88 = scmp.eq.s32.totalorder %s87, 0
      %s90 = sadd.s32 %s89, 1
      %s91 = scalar_select %p88, %s89, %s90
      %p94 = pneg %p88
      %p95 = scmp.eq.s32.totalorder %s15, 1
      %p96 = por %p94, %p95
      %p97 = scmp.ne.s32.totalorder %s89, %s92
      %p98 = scmp.eq.s32.totalorder %s15, 0
      %p99 = por %p97, %p98
      %p100 = scmp.ne.s32.totalorder %s89, %s92
      %p101 = scmp.eq.s32.totalorder %s20, 1
      %p102 = por %p100, %p101
      %p103 = scmp.ne.s32.totalorder %s92, %s93
      %p104 = scmp.eq.s32.totalorder %s20, 0
      %p105 = por %p103, %p104
      %p106 = scmp.ne.s32.totalorder %s92, %s93
      %p107 = scmp.eq.s32.totalorder %s21, 1
      %p108 = por %p106, %p107
      %p110 = scmp.ne.s32.totalorder %s93, %s109
      %p111 = scmp.eq.s32.totalorder %s21, 0
      %p112 = por %p110, %p111
      %s113 = ssub.s32 %s23, %s30
      %p114 = scmp.eq.s32.totalorder %s113, 0
      %s116 = sadd.s32 %s115, 1
      %s117 = scalar_select %p114, %s115, %s116
      %p120 = pneg %p114
      %p121 = scmp.eq.s32.totalorder %s15, 1
      %p122 = por %p120, %p121
      %p123 = scmp.ne.s32.totalorder %s115, %s118
      %p124 = scmp.eq.s32.totalorder %s15, 0
      %p125 = por %p123, %p124
      %p126 = scmp.ne.s32.totalorder %s115, %s118
      %p127 = scmp.eq.s32.totalorder %s20, 1
      %p128 = por %p126, %p127
      %p129 = scmp.ne.s32.totalorder %s118, %s119
      %p130 = scmp.eq.s32.totalorder %s20, 0
      %p131 = por %p129, %p130
      %p132 = scmp.ne.s32.totalorder %s118, %s119
      %p133 = scmp.eq.s32.totalorder %s21, 1
      %p134 = por %p132, %p133
      %p136 = scmp.ne.s32.totalorder %s119, %s135
      %p137 = scmp.eq.s32.totalorder %s21, 0
      %p138 = por %p136, %p137
      %s139 = ssub.s32 %s23, %s30
      %p140 = scmp.eq.s32.totalorder %s139, 0
      %s142 = sadd.s32 %s141, 1
      %s143 = scalar_select %p140, %s141, %s142
      %p146 = pneg %p140
      %p147 = scmp.eq.s32.totalorder %s15, 1
      %p148 = por %p146, %p147
      %p149 = scmp.ne.s32.totalorder %s141, %s144
      %p150 = scmp.eq.s32.totalorder %s15, 0
      %p151 = por %p149, %p150
      %p152 = scmp.ne.s32.totalorder %s141, %s144
      %p153 = scmp.eq.s32.totalorder %s20, 1
      %p154 = por %p152, %p153
      %p155 = scmp.ne.s32.totalorder %s144, %s145
      %p156 = scmp.eq.s32.totalorder %s20, 0
      %p157 = por %p155, %p156
      %p158 = scmp.ne.s32.totalorder %s144, %s145
      %p159 = scmp.eq.s32.totalorder %s21, 1
      %p160 = por %p158, %p159
      %p162 = scmp.ne.s32.totalorder %s145, %s161
      %p163 = scmp.eq.s32.totalorder %s21, 0
      %p164 = por %p162, %p163
      %s165 = ssub.s32 %s23, %s30
      %s166 = ssub.s32 %s23, %s30
      %s167 = sor.u32 %s165, %s166
      %p168 = scmp.eq.s32.totalorder %s167, 0
      %s170 = sadd.s32 %s169, 1
      %s171 = scalar_select %p168, %s169, %s170
      %p174 = pneg %p168
      %p175 = scmp.eq.s32.totalorder %s15, 1
      %p176 = por %p174, %p175
      %p177 = scmp.ne.s32.totalorder %s169, %s172
      %p178 = scmp.eq.s32.totalorder %s15, 0
      %p179 = por %p177, %p178
      %p180 = scmp.ne.s32.totalorder %s169, %s172
      %p181 = scmp.eq.s32.totalorder %s20, 1
      %p182 = por %p180, %p181
      %p183 = scmp.ne.s32.totalorder %s172, %s173
      %p184 = scmp.eq.s32.totalorder %s20, 0
      %p185 = por %p183, %p184
      %p186 = scmp.ne.s32.totalorder %s172, %s173
      %p187 = scmp.eq.s32.totalorder %s21, 1
      %p188 = por %p186, %p187
      %p190 = scmp.ne.s32.totalorder %s173, %s189
      %p191 = scmp.eq.s32.totalorder %s21, 0
      %p192 = por %p190, %p191
      %s193 = ssub.s32 %s22, %s34
      %s194 = ssub.s32 %s23, %s30
      %s195 = sor.u32 %s193, %s194
      %p196 = scmp.eq.s32.totalorder %s195, 0
      %s198 = sadd.s32 %s197, 1
      %s199 = scalar_select %p196, %s197, %s198
      %p202 = pneg %p196
      %p203 = scmp.eq.s32.totalorder %s15, 1
      %p204 = por %p202, %p203
      %p205 = scmp.ne.s32.totalorder %s197, %s200
      %p206 = scmp.eq.s32.totalorder %s15, 0
      %p207 = por %p205, %p206
      %p208 = scmp.ne.s32.totalorder %s197, %s200
      %p209 = scmp.eq.s32.totalorder %s20, 1
      %p210 = por %p208, %p209
      %p211 = scmp.ne.s32.totalorder %s200, %s201
      %p212 = scmp.eq.s32.totalorder %s20, 0
      %p213 = por %p211, %p212
      %p214 = scmp.ne.s32.totalorder %s200, %s201
      %p215 = scmp.eq.s32.totalorder %s21, 1
      %p216 = por %p214, %p215
      %p218 = scmp.ne.s32.totalorder %s201, %s217
      %p219 = scmp.eq.s32.totalorder %s21, 0
      %p220 = por %p218, %p219
      %p221 = scmp.le.s32.totalorder 1, %s15
      %p222 = scmp.lt.s32.totalorder %s15, 3
      %p223 = pnand %p221, %p222
      %p224 = pneg %p223
      // Predicated region
      $region9: #{tpu_custom_call.1} parent=5 // pred_check
        _
      $region10: #{tpu_custom_call.1} parent=5 // pred_check_branch
        %226 = sbr.rel (%p223) target = $region12
      $region11: #{tpu_custom_call.1} parent=5 // pred_region
        %s227 = ssub.s32 %s15, 1
        // Predicated region
        $region13: #{tpu_custom_call.1} parent=11 // pred_check
          %p228 = pneg %p79
        $region14: #{tpu_custom_call.1} parent=11 // pred_check_branch
          %230 = sbr.rel (%p228) target = $region16
        $region15: #{tpu_custom_call.1} parent=11 // pred_region
          %p231 = scmp.lt.s32.totalorder %s25, 0
          %s232 = scalar_select %p231, %s25, 0
          %s233 = smul.addr %s232, 8
          %s234 = scalar_lea.vmem %s1, %s233
        $region16: #{tpu_custom_call.1} parent=11 // pred_fallthru
          _
        // Predicated region
        $region17: #{tpu_custom_call.1} parent=11 // pred_check
          %p235 = pneg %p105
        $region18: #{tpu_custom_call.1} parent=11 // pred_check_branch
          %237 = sbr.rel (%p235) target = $region20
        $region19: #{tpu_custom_call.1} parent=11 // pred_region
          %p238 = scmp.lt.s32.totalorder %s25, 0
          %s239 = scalar_select %p238, %s25, 0
          %s240 = scalar_lea.vmem %s2, %s239
        $region20: #{tpu_custom_call.1} parent=11 // pred_fallthru
          _
        // Predicated region
        $region21: #{tpu_custom_call.1} parent=11 // pred_check
          %p241 = pneg %p131
        $region22: #{tpu_custom_call.1} parent=11 // pred_check_branch
          %243 = sbr.rel (%p241) target = $region24
        $region23: #{tpu_custom_call.1} parent=11 // pred_region
          %p244 = scmp.lt.s32.totalorder %s25, 0
          %s245 = scalar_select %p244, %s25, 0
          %s246 = scalar_lea.vmem %s3, %s245
        $region24: #{tpu_custom_call.1} parent=11 // pred_fallthru
          _
        // Predicated region
        $region25: #{tpu_custom_call.1} parent=11 // pred_check
          %p247 = pneg %p157
        $region26: #{tpu_custom_call.1} parent=11 // pred_check_branch
          %249 = sbr.rel (%p247) target = $region28
        $region27: #{tpu_custom_call.1} parent=11 // pred_region
          %p250 = scmp.lt.s32.totalorder %s25, 0
          %s251 = scalar_select %p250, %s25, 0
          %s252 = scalar_lea.vmem %s4, %s251
        $region28: #{tpu_custom_call.1} parent=11 // pred_fallthru
          _
        // Predicated region
        $region29: #{tpu_custom_call.1} parent=11 // pred_check
          %p253 = pneg %p185
        $region30: #{tpu_custom_call.1} parent=11 // pred_check_branch
          %255 = sbr.rel (%p253) target = $region32
        $region31: #{tpu_custom_call.1} parent=11 // pred_region
          %s256 = smul.u32 16, %s25
          %p257 = scmp.lt.s32.totalorder %s256, 15
          %s258 = scalar_select %p257, %s256, 15
          %p259 = scmp.lt.s32.totalorder %s25, 0
          %s260 = scalar_select %p259, %s25, 0
          %s261 = sadd.s32 %s260, %s258
          %s262 = smul.addr %s261, 8
          %s263 = scalar_lea.vmem %s5, %s262
          %s264 = smul.u32 16, %s25
        $region32: #{tpu_custom_call.1} parent=11 // pred_fallthru
          _
      $region12: #{tpu_custom_call.1} parent=5 // pred_fallthru
        _
      %p265 = scmp.lt.s32.totalorder %s15, 2
      // Predicated region
      $region33: #{tpu_custom_call.1} parent=5 // pred_check
        %p266 = pneg %p265
      $region34: #{tpu_custom_call.1} parent=5 // pred_check_branch
        %268 = sbr.rel (%p266) target = $region36
      $region35: #{tpu_custom_call.1} parent=5 // pred_region
        // Predicated region
        $region37: #{tpu_custom_call.1} parent=35 // pred_check
          %p269 = pneg %p47
        $region38: #{tpu_custom_call.1} parent=35 // pred_check_branch
          %271 = sbr.rel (%p269) target = $region40
        $region39: #{tpu_custom_call.1} parent=35 // pred_region
          %p272 = scmp.lt.s32.totalorder %s22, 1
          %s273 = scalar_select %p272, %s22, 1
          %s274 = smul.addr %s273, 32
          %s275 = smul.addr %s274, 8
          %s276 = scalar_lea.vmem %s0, %s275
        $region40: #{tpu_custom_call.1} parent=35 // pred_fallthru
          _
      $region36: #{tpu_custom_call.1} parent=5 // pred_fallthru
        _
      %p277 = scmp.le.s32.totalorder 1, %s15
      %p278 = scmp.lt.s32.totalorder %s15, 3
      %p279 = pnand %p277, %p278
      %p280 = pneg %p279
      // Predicated region
      $region41: #{tpu_custom_call.1} parent=5 // pred_check
        _
      $region42: #{tpu_custom_call.1} parent=5 // pred_check_branch
        %282 = sbr.rel (%p279) target = $region44
      $region43: #{tpu_custom_call.1} parent=5 // pred_region
        %s283 = ssub.s32 %s15, 1
        %p284 = scmp.lt.s32.totalorder %s24, 1
        %s285 = scalar_select %p284, %s24, 1
        %s286 = smul.addr %s285, 32
        %s287 = smul.addr %s286, 8
        %s288 = scalar_lea.vmem %s0, %s287
        %p289 = pneg %p53
        %p290 = pneg %p50
        %p291 = scmp.lt.s32.totalorder %s25, 0
        %s292 = scalar_select %p291, %s25, 0
        %s293 = smul.addr %s292, 8
        %s294 = scalar_lea.vmem %s1, %s293
        %p295 = pneg %p79
        %p296 = pneg %p76
        %p297 = scmp.lt.s32.totalorder %s25, 0
        %s298 = scalar_select %p297, %s25, 0
        %s299 = scalar_lea.vmem %s2, %s298
        %p300 = pneg %p105
        %p301 = pneg %p102
        %p302 = scmp.lt.s32.totalorder %s25, 0
        %s303 = scalar_select %p302, %s25, 0
        %s304 = scalar_lea.vmem %s3, %s303
        %p305 = pneg %p131
        %p306 = pneg %p128
        %p307 = scmp.lt.s32.totalorder %s25, 0
        %s308 = scalar_select %p307, %s25, 0
        %s309 = scalar_lea.vmem %s4, %s308
        %p310 = pneg %p157
        %p311 = pneg %p154
        %s312 = smul.u32 16, %s25
        %p313 = scmp.lt.s32.totalorder %s312, 15
        %s314 = scalar_select %p313, %s312, 15
        %p315 = scmp.lt.s32.totalorder %s25, 0
        %s316 = scalar_select %p315, %s25, 0
        %s317 = sadd.s32 %s316, %s314
        %s318 = smul.addr %s317, 8
        %s319 = scalar_lea.vmem %s5, %s318
        %p320 = pneg %p185
        %p321 = pneg %p182
        %p322 = pneg %p213
        %p323 = pneg %p210
        %s324 = sand.u32 %s200, 1
        %s325 = scalar_lea.sflag [#allocation3], %s324
        %s326 = sand.u32 %s200, 1
        %s327 = smul.addr %s326, 256
        %s328 = scalar_lea.vmem [#allocation2], %s327
        %p329 = scmp.lt.s32.totalorder %s24, 1
        %s330 = scalar_select %p329, %s24, 1
        %s331 = smul.addr %s330, 32
        %s332 = smul.addr %s331, 8
        %s333 = scalar_lea.vmem %s0, %s332
        %p334 = scmp.lt.s32.totalorder %s25, 0
        %s335 = scalar_select %p334, %s25, 0
        %s336 = smul.addr %s335, 8
        %s337 = scalar_lea.vmem %s1, %s336
        %p338 = scmp.lt.s32.totalorder %s25, 0
        %s339 = scalar_select %p338, %s25, 0
        %s340 = scalar_lea.vmem %s2, %s339
        %p341 = scmp.lt.s32.totalorder %s25, 0
        %s342 = scalar_select %p341, %s25, 0
        %s343 = scalar_lea.vmem %s3, %s342
        %p344 = scmp.lt.s32.totalorder %s25, 0
        %s345 = scalar_select %p344, %s25, 0
        %s346 = scalar_lea.vmem %s4, %s345
        %s347 = smul.u32 16, %s25
        %p348 = scmp.lt.s32.totalorder %s347, 15
        %s349 = scalar_select %p348, %s347, 15
        %p350 = scmp.lt.s32.totalorder %s25, 0
        %s351 = scalar_select %p350, %s25, 0
        %s352 = sadd.s32 %s351, %s349
        %s353 = smul.addr %s352, 8
        %s354 = scalar_lea.vmem %s5, %s353
        %s355 = smul.u32 16, %s25
        %v356 = vld [vmem:[%s333] sm:$0xff]
        %v357 = vld [vmem:[%s333 + $0x8] sm:$0xff]
        %v358 = vld [vmem:[%s333 + $0x10] sm:$0xff]
        %v359 = vld [vmem:[%s333 + $0x18] sm:$0xff]
        %v360 = vld [vmem:[%s333 + $0x20] sm:$0xff]
        %v361 = vld [vmem:[%s333 + $0x28] sm:$0xff]
        %v362 = vld [vmem:[%s333 + $0x30] sm:$0xff]
        %v363 = vld [vmem:[%s333 + $0x38] sm:$0xff]
        %v364 = vld [vmem:[%s333 + $0x40] sm:$0xff]
        %v365 = vld [vmem:[%s333 + $0x48] sm:$0xff]
        %v366 = vld [vmem:[%s333 + $0x50] sm:$0xff]
        %v367 = vld [vmem:[%s333 + $0x58] sm:$0xff]
        %v368 = vld [vmem:[%s333 + $0x60] sm:$0xff]
        %v369 = vld [vmem:[%s333 + $0x68] sm:$0xff]
        %v370 = vld [vmem:[%s333 + $0x70] sm:$0xff]
        %v371 = vld [vmem:[%s333 + $0x78] sm:$0xff]
        %v372 = vld [vmem:[%s333 + $0x80] sm:$0xff]
        %v373 = vld [vmem:[%s333 + $0x88] sm:$0xff]
        %v374 = vld [vmem:[%s333 + $0x90] sm:$0xff]
        %v375 = vld [vmem:[%s333 + $0x98] sm:$0xff]
        %v376 = vld [vmem:[%s333 + $0xa0] sm:$0xff]
        %v377 = vld [vmem:[%s333 + $0xa8] sm:$0xff]
        %v378 = vld [vmem:[%s333 + $0xb0] sm:$0xff]
        %v379 = vld [vmem:[%s333 + $0xb8] sm:$0xff]
        %v380 = vld [vmem:[%s333 + $0xc0] sm:$0xff]
        %v381 = vld [vmem:[%s333 + $0xc8] sm:$0xff]
        %v382 = vld [vmem:[%s333 + $0xd0] sm:$0xff]
        %v383 = vld [vmem:[%s333 + $0xd8] sm:$0xff]
        %v384 = vld [vmem:[%s333 + $0xe0] sm:$0xff]
        %v385 = vld [vmem:[%s333 + $0xe8] sm:$0xff]
        %v386 = vld [vmem:[%s333 + $0xf0] sm:$0xff]
        %v387 = vld [vmem:[%s333 + $0xf8] sm:$0xff]
        %v388 = vld [vmem:[%s337] sm:$0xff]
        %v389 = vld [vmem:[%s337 + $0x8] sm:$0xff]
        %v390 = vld [vmem:[%s337 + $0x10] sm:$0xff]
        %v391 = vld [vmem:[%s337 + $0x18] sm:$0xff]
        %v392 = vld [vmem:[%s337 + $0x20] sm:$0xf]
        %vm393 = vcmask 293888
        %v395 = vsel %vm393, %v356, 0
        %v398 = vsel %vm393, %v357, 0
        %v401 = vsel %vm393, %v358, 0
        %v404 = vsel %vm393, %v359, 0
        %v407 = vsel %vm393, %v360, 0
        %v410 = vsel %vm393, %v361, 0
        %v413 = vsel %vm393, %v362, 0
        %v416 = vsel %vm393, %v363, 0
        %v419 = vsel %vm393, %v364, 0
        %v422 = vsel %vm393, %v365, 0
        %v425 = vsel %vm393, %v366, 0
        %v428 = vsel %vm393, %v367, 0
        %v431 = vsel %vm393, %v368, 0
        %v434 = vsel %vm393, %v369, 0
        %v437 = vsel %vm393, %v370, 0
        %v440 = vsel %vm393, %v371, 0
        %v443 = vsel %vm393, %v372, 0
        %v446 = vsel %vm393, %v373, 0
        %v449 = vsel %vm393, %v374, 0
        %v452 = vsel %vm393, %v375, 0
        %v455 = vsel %vm393, %v376, 0
        %v458 = vsel %vm393, %v377, 0
        %v461 = vsel %vm393, %v378, 0
        %v464 = vsel %vm393, %v379, 0
        %v467 = vsel %vm393, %v380, 0
        %v470 = vsel %vm393, %v381, 0
        %v473 = vsel %vm393, %v382, 0
        %v476 = vsel %vm393, %v383, 0
        %v479 = vsel %vm393, %v384, 0
        %v482 = vsel %vm393, %v385, 0
        %v485 = vsel %vm393, %v386, 0
        %v488 = vsel %vm393, %v387, 0
        %vm490 = vcmask 1043456
        %v492 = vsel %vm490, %v392, 0
        %494 = vmatprep.subr.mxu0 0.0
        %495 = vmatpush1.msra.mxu0 %v388
        %496 = vmatprep.subr.mxu0 0.0
        %497 = vmatpush1.msra.mxu0 %v389
        %498 = vmatprep.subr.mxu0 0.0
        %499 = vmatpush1.msra.mxu0 %v390
        %500 = vmatprep.subr.mxu0 0.0
        %501 = vmatpush1.msra.mxu0 %v391
        %502 = vmatprep.subr.mxu0 0.0
        %503 = vmatpush1.msra.mxu0 %v492
        %504 = vmatprep.subr.mxu0 0.0
        %505 = vmatpush1.msra.mxu0 0.0
        %506 = vmatprep.subr.mxu0 0.0
        %507 = vmatpush1.msra.mxu0 0.0
        %508 = vmatprep.subr.mxu0 0.0
        %509 = vmatpush1.msra.mxu0 0.0
        %510 = vmatprep.subr.mxu0 0.0
        %511 = vmatpush1.msra.mxu0 0.0
        %512 = vmatprep.subr.mxu0 0.0
        %513 = vmatpush1.msra.mxu0 0.0
        %514 = vmatprep.subr.mxu0 0.0
        %515 = vmatpush1.msra.mxu0 0.0
        %516 = vmatprep.subr.mxu0 0.0
        %517 = vmatpush1.msra.mxu0 0.0
        %518 = vmatprep.subr.mxu0 0.0
        %519 = vmatpush1.msra.mxu0 0.0
        %520 = vmatprep.subr.mxu0 0.0
        %521 = vmatpush1.msra.mxu0 0.0
        %522 = vmatprep.subr.mxu0 0.0
        %523 = vmatpush1.msra.mxu0 0.0
        %524 = vmatprep.subr.mxu0 0.0
        %525 = vmatpush1.msra.mxu0 0.0
        %526 = vmatprep.subr.mxu0 0.0
        %527 = vmatpush1.msra.mxu0 0.0
        %528 = vmatprep.subr.mxu0 0.0
        %529 = vmatpush1.msra.mxu0 0.0
        %530 = vmatprep.subr.mxu0 0.0
        %531 = vmatpush1.msra.mxu0 0.0
        %532 = vmatprep.subr.mxu0 0.0
        %533 = vmatpush1.msra.mxu0 0.0
        %534 = vmatprep.subr.mxu0 0.0
        %535 = vmatpush1.msra.mxu0 0.0
        %536 = vmatprep.subr.mxu0 0.0
        %537 = vmatpush1.msra.mxu0 0.0
        %538 = vmatprep.subr.mxu0 0.0
        %539 = vmatpush1.msra.mxu0 0.0
        %540 = vmatprep.subr.mxu0 0.0
        %541 = vmatpush1.msra.mxu0 0.0
        %542 = vmatprep.subr.mxu0 0.0
        %543 = vmatpush1.msra.mxu0 0.0
        %544 = vmatprep.subr.mxu0 0.0
        %545 = vmatpush1.msra.mxu0 0.0
        %546 = vmatprep.subr.mxu0 0.0
        %547 = vmatpush1.msra.mxu0 0.0
        %548 = vmatprep.subr.mxu0 0.0
        %549 = vmatpush1.msra.mxu0 0.0
        %550 = vmatprep.subr.mxu0 0.0
        %551 = vmatpush1.msra.mxu0 0.0
        %552 = vmatprep.subr.mxu0 0.0
        %553 = vmatpush1.msra.mxu0 0.0
        %554 = vmatprep.subr.mxu0 0.0
        %555 = vmatpush1.msra.mxu0 0.0
        %556 = vmatprep.subr.mxu0 0.0
        %557 = vmatpush1.msra.mxu0 0.0
        %558 = vmatprep.mubr.f32.mxu0 0.0
        %559 = vmatmul.mubr.f32.gmra.mrb[0].mxu0 %v395
        %v560 = vpop.f32.mrb[0].mxu0
        %v561 = vadd.f32 0.0, %v560
        %v562 = vpop.f32.mrb[0].mxu0
        %563 = vmatprep.mubr.f32.mxu0 0.0
        %564 = vmatmul.mubr.f32.gmra.mrb[0].mxu0 %v398
        %v565 = vpop.f32.mrb[0].mxu0
        %v566 = vadd.f32 0.0, %v565
        %v567 = vpop.f32.mrb[0].mxu0
        %568 = vmatprep.mubr.f32.mxu0 0.0
        %569 = vmatmul.mubr.f32.gmra.mrb[0].mxu0 %v401
        %v570 = vpop.f32.mrb[0].mxu0
        %v571 = vadd.f32 0.0, %v570
        %v572 = vpop.f32.mrb[0].mxu0
        %573 = vmatprep.mubr.f32.mxu0 0.0
        %574 = vmatmul.mubr.f32.gmra.mrb[0].mxu0 %v404
        %v575 = vpop.f32.mrb[0].mxu0
        %v576 = vadd.f32 0.0, %v575
        %v577 = vpop.f32.mrb[0].mxu0
        %578 = vmatprep.mubr.f32.mxu0 0.0
        %579 = vmatmul.mubr.f32.gmra.mrb[0].mxu0 %v407
        %v580 = vpop.f32.mrb[0].mxu0
        %v581 = vadd.f32 0.0, %v580
        %v582 = vpop.f32.mrb[0].mxu0
        %583 = vmatprep.mubr.f32.mxu0 0.0
        %584 = vmatmul.mubr.f32.gmra.mrb[0].mxu0 %v410
        %v585 = vpop.f32.mrb[0].mxu0
        %v586 = vadd.f32 0.0, %v585
        %v587 = vpop.f32.mrb[0].mxu0
        %588 = vmatprep.mubr.f32.mxu0 0.0
        %589 = vmatmul.mubr.f32.gmra.mrb[0].mxu0 %v413
        %v590 = vpop.f32.mrb[0].mxu0
        %v591 = vadd.f32 0.0, %v590
        %v592 = vpop.f32.mrb[0].mxu0
        %593 = vmatprep.mubr.f32.mxu0 0.0
        %594 = vmatmul.mubr.f32.gmra.mrb[0].mxu0 %v416
        %v595 = vpop.f32.mrb[0].mxu0
        %v596 = vadd.f32 0.0, %v595
        %v597 = vpop.f32.mrb[0].mxu0
        %598 = vmatprep.mubr.f32.mxu0 0.0
        %599 = vmatmul.mubr.f32.gmra.mrb[0].mxu0 %v419
        %v600 = vpop.f32.mrb[0].mxu0
        %v601 = vadd.f32 0.0, %v600
        %v602 = vpop.f32.mrb[0].mxu0
        %603 = vmatprep.mubr.f32.mxu0 0.0
        %604 = vmatmul.mubr.f32.gmra.mrb[0].mxu0 %v422
        %v605 = vpop.f32.mrb[0].mxu0
        %v606 = vadd.f32 0.0, %v605
        %v607 = vpop.f32.mrb[0].mxu0
        %608 = vmatprep.mubr.f32.mxu0 0.0
        %609 = vmatmul.mubr.f32.gmra.mrb[0].mxu0 %v425
        %v610 = vpop.f32.mrb[0].mxu0
        %v611 = vadd.f32 0.0, %v610
        %v612 = vpop.f32.mrb[0].mxu0
        %613 = vmatprep.mubr.f32.mxu0 0.0
        %614 = vmatmul.mubr.f32.gmra.mrb[0].mxu0 %v428
        %v615 = vpop.f32.mrb[0].mxu0
        %v616 = vadd.f32 0.0, %v615
        %v617 = vpop.f32.mrb[0].mxu0
        %618 = vmatprep.mubr.f32.mxu0 0.0
        %619 = vmatmul.mubr.f32.gmra.mrb[0].mxu0 %v431
        %v620 = vpop.f32.mrb[0].mxu0
        %v621 = vadd.f32 0.0, %v620
        %v622 = vpop.f32.mrb[0].mxu0
        %623 = vmatprep.mubr.f32.mxu0 0.0
        %624 = vmatmul.mubr.f32.gmra.mrb[0].mxu0 %v434
        %v625 = vpop.f32.mrb[0].mxu0
        %v626 = vadd.f32 0.0, %v625
        %v627 = vpop.f32.mrb[0].mxu0
        %628 = vmatprep.mubr.f32.mxu0 0.0
        %629 = vmatmul.mubr.f32.gmra.mrb[0].mxu0 %v437
        %v630 = vpop.f32.mrb[0].mxu0
        %v631 = vadd.f32 0.0, %v630
        %v632 = vpop.f32.mrb[0].mxu0
        %633 = vmatprep.mubr.f32.mxu0 0.0
        %634 = vmatmul.mubr.f32.gmra.mrb[0].mxu0 %v440
        %v635 = vpop.f32.mrb[0].mxu0
        %v636 = vadd.f32 0.0, %v635
        %v637 = vpop.f32.mrb[0].mxu0
        %638 = vmatprep.mubr.f32.mxu0 0.0
        %639 = vmatmul.mubr.f32.gmra.mrb[0].mxu0 %v443
        %v640 = vpop.f32.mrb[0].mxu0
        %v641 = vadd.f32 0.0, %v640
        %v642 = vpop.f32.mrb[0].mxu0
        %643 = vmatprep.mubr.f32.mxu0 0.0
        %644 = vmatmul.mubr.f32.gmra.mrb[0].mxu0 %v446
        %v645 = vpop.f32.mrb[0].mxu0
        %v646 = vadd.f32 0.0, %v645
        %v647 = vpop.f32.mrb[0].mxu0
        %648 = vmatprep.mubr.f32.mxu0 0.0
        %649 = vmatmul.mubr.f32.gmra.mrb[0].mxu0 %v449
        %v650 = vpop.f32.mrb[0].mxu0
        %v651 = vadd.f32 0.0, %v650
        %v652 = vpop.f32.mrb[0].mxu0
        %653 = vmatprep.mubr.f32.mxu0 0.0
        %654 = vmatmul.mubr.f32.gmra.mrb[0].mxu0 %v452
        %v655 = vpop.f32.mrb[0].mxu0
        %v656 = vadd.f32 0.0, %v655
        %v657 = vpop.f32.mrb[0].mxu0
        %658 = vmatprep.mubr.f32.mxu0 0.0
        %659 = vmatmul.mubr.f32.gmra.mrb[0].mxu0 %v455
        %v660 = vpop.f32.mrb[0].mxu0
        %v661 = vadd.f32 0.0, %v660
        %v662 = vpop.f32.mrb[0].mxu0
        %663 = vmatprep.mubr.f32.mxu0 0.0
        %664 = vmatmul.mubr.f32.gmra.mrb[0].mxu0 %v458
        %v665 = vpop.f32.mrb[0].mxu0
        %v666 = vadd.f32 0.0, %v665
        %v667 = vpop.f32.mrb[0].mxu0
        %668 = vmatprep.mubr.f32.mxu0 0.0
        %669 = vmatmul.mubr.f32.gmra.mrb[0].mxu0 %v461
        %v670 = vpop.f32.mrb[0].mxu0
        %v671 = vadd.f32 0.0, %v670
        %v672 = vpop.f32.mrb[0].mxu0
        %673 = vmatprep.mubr.f32.mxu0 0.0
        %674 = vmatmul.mubr.f32.gmra.mrb[0].mxu0 %v464
        %v675 = vpop.f32.mrb[0].mxu0
        %v676 = vadd.f32 0.0, %v675
        %v677 = vpop.f32.mrb[0].mxu0
        %678 = vmatprep.mubr.f32.mxu0 0.0
        %679 = vmatmul.mubr.f32.gmra.mrb[0].mxu0 %v467
        %v680 = vpop.f32.mrb[0].mxu0
        %v681 = vadd.f32 0.0, %v680
        %v682 = vpop.f32.mrb[0].mxu0
        %683 = vmatprep.mubr.f32.mxu0 0.0
        %684 = vmatmul.mubr.f32.gmra.mrb[0].mxu0 %v470
        %v685 = vpop.f32.mrb[0].mxu0
        %v686 = vadd.f32 0.0, %v685
        %v687 = vpop.f32.mrb[0].mxu0
        %688 = vmatprep.mubr.f32.mxu0 0.0
        %689 = vmatmul.mubr.f32.gmra.mrb[0].mxu0 %v473
        %v690 = vpop.f32.mrb[0].mxu0
        %v691 = vadd.f32 0.0, %v690
        %v692 = vpop.f32.mrb[0].mxu0
        %693 = vmatprep.mubr.f32.mxu0 0.0
        %694 = vmatmul.mubr.f32.gmra.mrb[0].mxu0 %v476
        %v695 = vpop.f32.mrb[0].mxu0
        %v696 = vadd.f32 0.0, %v695
        %v697 = vpop.f32.mrb[0].mxu0
        %698 = vmatprep.mubr.f32.mxu0 0.0
        %699 = vmatmul.mubr.f32.gmra.mrb[0].mxu0 %v479
        %v700 = vpop.f32.mrb[0].mxu0
        %v701 = vadd.f32 0.0, %v700
        %v702 = vpop.f32.mrb[0].mxu0
        %703 = vmatprep.mubr.f32.mxu0 0.0
        %704 = vmatmul.mubr.f32.gmra.mrb[0].mxu0 %v482
        %v705 = vpop.f32.mrb[0].mxu0
        %v706 = vadd.f32 0.0, %v705
        %v707 = vpop.f32.mrb[0].mxu0
        %708 = vmatprep.mubr.f32.mxu0 0.0
        %709 = vmatmul.mubr.f32.gmra.mrb[0].mxu0 %v485
        %v710 = vpop.f32.mrb[0].mxu0
        %v711 = vadd.f32 0.0, %v710
        %v712 = vpop.f32.mrb[0].mxu0
        %713 = vmatprep.mubr.f32.mxu0 0.0
        %714 = vmatmul.mubr.f32.gmra.mrb[0].mxu0 %v488
        %v715 = vpop.f32.mrb[0].mxu0
        %v716 = vadd.f32 0.0, %v715
        %v717 = vpop.f32.mrb[0].mxu0
        %718 = vdwg.mxu0
        %719 = vmatprep.subr.mxu0 0.0
        %720 = vmatpush1.msra.mxu0 %v561
        %721 = vmatprep.subr.mxu0 0.0
        %722 = vmatpush1.msra.mxu0 %v566
        %723 = vmatprep.subr.mxu0 0.0
        %724 = vmatpush1.msra.mxu0 %v571
        %725 = vmatprep.subr.mxu0 0.0
        %726 = vmatpush1.msra.mxu0 %v576
        %727 = vmatprep.subr.mxu0 0.0
        %728 = vmatpush1.msra.mxu0 %v581
        %729 = vmatprep.subr.mxu0 0.0
        %730 = vmatpush1.msra.mxu0 %v586
        %731 = vmatprep.subr.mxu0 0.0
        %732 = vmatpush1.msra.mxu0 %v591
        %733 = vmatprep.subr.mxu0 0.0
        %734 = vmatpush1.msra.mxu0 %v596
        %735 = vmatprep.subr.mxu0 0.0
        %736 = vmatpush1.msra.mxu0 %v601
        %737 = vmatprep.subr.mxu0 0.0
        %738 = vmatpush1.msra.mxu0 %v606
        %739 = vmatprep.subr.mxu0 0.0
        %740 = vmatpush1.msra.mxu0 %v611
        %741 = vmatprep.subr.mxu0 0.0
        %742 = vmatpush1.msra.mxu0 %v616
        %743 = vmatprep.subr.mxu0 0.0
        %744 = vmatpush1.msra.mxu0 %v621
        %745 = vmatprep.subr.mxu0 0.0
        %746 = vmatpush1.msra.mxu0 %v626
        %747 = vmatprep.subr.mxu0 0.0
        %748 = vmatpush1.msra.mxu0 %v631
        %749 = vmatprep.subr.mxu0 0.0
        %750 = vmatpush1.msra.mxu0 %v636
        %751 = vmatprep.subr.mxu0 0.0
        %752 = vmatpush1.msra.mxu0 %v641
        %753 = vmatprep.subr.mxu0 0.0
        %754 = vmatpush1.msra.mxu0 %v646
        %755 = vmatprep.subr.mxu0 0.0
        %756 = vmatpush1.msra.mxu0 %v651
        %757 = vmatprep.subr.mxu0 0.0
        %758 = vmatpush1.msra.mxu0 %v656
        %759 = vmatprep.subr.mxu0 0.0
        %760 = vmatpush1.msra.mxu0 %v661
        %761 = vmatprep.subr.mxu0 0.0
        %762 = vmatpush1.msra.mxu0 %v666
        %763 = vmatprep.subr.mxu0 0.0
        %764 = vmatpush1.msra.mxu0 %v671
        %765 = vmatprep.subr.mxu0 0.0
        %766 = vmatpush1.msra.mxu0 %v676
        %767 = vmatprep.subr.mxu0 0.0
        %768 = vmatpush1.msra.mxu0 %v681
        %769 = vmatprep.subr.mxu0 0.0
        %770 = vmatpush1.msra.mxu0 %v686
        %771 = vmatprep.subr.mxu0 0.0
        %772 = vmatpush1.msra.mxu0 %v691
        %773 = vmatprep.subr.mxu0 0.0
        %774 = vmatpush1.msra.mxu0 %v696
        %775 = vmatprep.subr.mxu0 0.0
        %776 = vmatpush1.msra.mxu0 %v701
        %777 = vmatprep.subr.mxu0 0.0
        %778 = vmatpush1.msra.mxu0 %v706
        %779 = vmatprep.subr.mxu0 0.0
        %780 = vmatpush1.msra.mxu0 %v711
        %781 = vmatprep.subr.mxu0 0.0
        %782 = vmatpush1.msra.mxu0 %v716
        %783 = vmatprep.mubr.f32.mxu0 1.0
        %784 = vmatmul.mubr.f32.gmra.mrb[0].mxu0 1.0
        %v785 = vpop.f32.mrb[0].mxu0
        %v786 = vadd.f32 0.0, %v785
        %v787 = vpop.f32.mrb[0].mxu0
        %788 = vdwg.mxu0
        %v789 = vmul.f32 %v561, %v561
        %v790 = vmul.f32 %v566, %v566
        %v791 = vmul.f32 %v571, %v571
        %v792 = vmul.f32 %v576, %v576
        %v793 = vmul.f32 %v581, %v581
        %v794 = vmul.f32 %v586, %v586
        %v795 = vmul.f32 %v591, %v591
        %v796 = vmul.f32 %v596, %v596
        %v797 = vmul.f32 %v601, %v601
        %v798 = vmul.f32 %v606, %v606
        %v799 = vmul.f32 %v611, %v611
        %v800 = vmul.f32 %v616, %v616
        %v801 = vmul.f32 %v621, %v621
        %v802 = vmul.f32 %v626, %v626
        %v803 = vmul.f32 %v631, %v631
        %v804 = vmul.f32 %v636, %v636
        %v805 = vmul.f32 %v641, %v641
        %v806 = vmul.f32 %v646, %v646
        %v807 = vmul.f32 %v651, %v651
        %v808 = vmul.f32 %v656, %v656
        %v809 = vmul.f32 %v661, %v661
        %v810 = vmul.f32 %v666, %v666
        %v811 = vmul.f32 %v671, %v671
        %v812 = vmul.f32 %v676, %v676
        %v813 = vmul.f32 %v681, %v681
        %v814 = vmul.f32 %v686, %v686
        %v815 = vmul.f32 %v691, %v691
        %v816 = vmul.f32 %v696, %v696
        %v817 = vmul.f32 %v701, %v701
        %v818 = vmul.f32 %v706, %v706
        %v819 = vmul.f32 %v711, %v711
        %v820 = vmul.f32 %v716, %v716
        %v821 = vld [vmem:[%s340] sm:$0x1]
        %v822 = vmul.f32 %v821, 256.0
        %v823 = vadd.f32 %v786, %v822
        %v824 = vmul.f32 %v821, 2.0
        %v825 = vmul.f32 %v824, %v786
        %826 = vmatprep.subr.mxu0 0.0
        %827 = vmatpush1.msra.mxu0 %v789
        %828 = vmatprep.subr.mxu0 0.0
        %829 = vmatpush1.msra.mxu0 %v790
        %830 = vmatprep.subr.mxu0 0.0
        %831 = vmatpush1.msra.mxu0 %v791
        %832 = vmatprep.subr.mxu0 0.0
        %833 = vmatpush1.msra.mxu0 %v792
        %834 = vmatprep.subr.mxu0 0.0
        %835 = vmatpush1.msra.mxu0 %v793
        %836 = vmatprep.subr.mxu0 0.0
        %837 = vmatpush1.msra.mxu0 %v794
        %838 = vmatprep.subr.mxu0 0.0
        %839 = vmatpush1.msra.mxu0 %v795
        %840 = vmatprep.subr.mxu0 0.0
        %841 = vmatpush1.msra.mxu0 %v796
        %842 = vmatprep.subr.mxu0 0.0
        %843 = vmatpush1.msra.mxu0 %v797
        %844 = vmatprep.subr.mxu0 0.0
        %845 = vmatpush1.msra.mxu0 %v798
        %846 = vmatprep.subr.mxu0 0.0
        %847 = vmatpush1.msra.mxu0 %v799
        %848 = vmatprep.subr.mxu0 0.0
        %849 = vmatpush1.msra.mxu0 %v800
        %850 = vmatprep.subr.mxu0 0.0
        %851 = vmatpush1.msra.mxu0 %v801
        %852 = vmatprep.subr.mxu0 0.0
        %853 = vmatpush1.msra.mxu0 %v802
        %854 = vmatprep.subr.mxu0 0.0
        %855 = vmatpush1.msra.mxu0 %v803
        %856 = vmatprep.subr.mxu0 0.0
        %857 = vmatpush1.msra.mxu0 %v804
        %858 = vmatprep.subr.mxu0 0.0
        %859 = vmatpush1.msra.mxu0 %v805
        %860 = vmatprep.subr.mxu0 0.0
        %861 = vmatpush1.msra.mxu0 %v806
        %862 = vmatprep.subr.mxu0 0.0
        %863 = vmatpush1.msra.mxu0 %v807
        %864 = vmatprep.subr.mxu0 0.0
        %865 = vmatpush1.msra.mxu0 %v808
        %866 = vmatprep.subr.mxu0 0.0
        %867 = vmatpush1.msra.mxu0 %v809
        %868 = vmatprep.subr.mxu0 0.0
        %869 = vmatpush1.msra.mxu0 %v810
        %870 = vmatprep.subr.mxu0 0.0
        %871 = vmatpush1.msra.mxu0 %v811
        %872 = vmatprep.subr.mxu0 0.0
        %873 = vmatpush1.msra.mxu0 %v812
        %874 = vmatprep.subr.mxu0 0.0
        %875 = vmatpush1.msra.mxu0 %v813
        %876 = vmatprep.subr.mxu0 0.0
        %877 = vmatpush1.msra.mxu0 %v814
        %878 = vmatprep.subr.mxu0 0.0
        %879 = vmatpush1.msra.mxu0 %v815
        %880 = vmatprep.subr.mxu0 0.0
        %881 = vmatpush1.msra.mxu0 %v816
        %882 = vmatprep.subr.mxu0 0.0
        %883 = vmatpush1.msra.mxu0 %v817
        %884 = vmatprep.subr.mxu0 0.0
        %885 = vmatpush1.msra.mxu0 %v818
        %886 = vmatprep.subr.mxu0 0.0
        %887 = vmatpush1.msra.mxu0 %v819
        %888 = vmatprep.subr.mxu0 0.0
        %889 = vmatpush1.msra.mxu0 %v820
        %890 = vmatprep.mubr.f32.mxu0 1.0
        %891 = vmatmul.mubr.f32.gmra.mrb[0].mxu0 1.0
        %v892 = vpop.f32.mrb[0].mxu0
        %v893 = vadd.f32 %v825, %v892
        %v894 = vpop.f32.mrb[0].mxu0
        %895 = vdwg.mxu0
        %v896 = vmul.f32 %v821, %v821
        %v897 = vmul.f32 %v896, 256.0
        %v898 = vadd.f32 %v893, %v897
        %v900 = vrot.slane %v898, 7
        %vm902 = vcmask 1040384
        %v903 = vsel %vm902, %v823, %v900
        %v904 = vld [vmem:[%s354] sm:$0xff]
        %v905 = vld [vmem:[%s354 + $0x8] sm:$0xff]
        %v906 = vld [vmem:[%s354 + $0x10] sm:$0xff]
        %v907 = vld [vmem:[%s354 + $0x18] sm:$0xff]
        %v908 = vld [vmem:[%s354 + $0x20] sm:$0xff]
        %v909 = vld [vmem:[%s354 + $0x28] sm:$0xff]
        %v910 = vld [vmem:[%s354 + $0x30] sm:$0xff]
        %v911 = vld [vmem:[%s354 + $0x38] sm:$0xff]
        %v912 = vld [vmem:[%s354 + $0x40] sm:$0xff]
        %v913 = vld [vmem:[%s354 + $0x48] sm:$0xff]
        %v914 = vld [vmem:[%s354 + $0x50] sm:$0xff]
        %v915 = vld [vmem:[%s354 + $0x58] sm:$0xff]
        %v916 = vld [vmem:[%s354 + $0x60] sm:$0xff]
        %v917 = vld [vmem:[%s354 + $0x68] sm:$0xff]
        %v918 = vld [vmem:[%s354 + $0x70] sm:$0xff]
        %v919 = vld [vmem:[%s354 + $0x78] sm:$0xff]
        %920 = vmatprep.subr.mxu0 0.0
        %921 = vmatpush1.msra.mxu0 %v904
        %922 = vmatprep.subr.mxu0 0.0
        %923 = vmatpush1.msra.mxu0 %v905
        %924 = vmatprep.subr.mxu0 0.0
        %925 = vmatpush1.msra.mxu0 %v906
        %926 = vmatprep.subr.mxu0 0.0
        %927 = vmatpush1.msra.mxu0 %v907
        %928 = vmatprep.subr.mxu0 0.0
        %929 = vmatpush1.msra.mxu0 %v908
        %930 = vmatprep.subr.mxu0 0.0
        %931 = vmatpush1.msra.mxu0 %v909
        %932 = vmatprep.subr.mxu0 0.0
        %933 = vmatpush1.msra.mxu0 %v910
        %934 = vmatprep.subr.mxu0 0.0
        %935 = vmatpush1.msra.mxu0 %v911
        %936 = vmatprep.subr.mxu0 0.0
        %937 = vmatpush1.msra.mxu0 %v912
        %938 = vmatprep.subr.mxu0 0.0
        %939 = vmatpush1.msra.mxu0 %v913
        %940 = vmatprep.subr.mxu0 0.0
        %941 = vmatpush1.msra.mxu0 %v914
        %942 = vmatprep.subr.mxu0 0.0
        %943 = vmatpush1.msra.mxu0 %v915
        %944 = vmatprep.subr.mxu0 0.0
        %945 = vmatpush1.msra.mxu0 %v916
        %946 = vmatprep.subr.mxu0 0.0
        %947 = vmatpush1.msra.mxu0 %v917
        %948 = vmatprep.subr.mxu0 0.0
        %949 = vmatpush1.msra.mxu0 %v918
        %950 = vmatprep.subr.mxu0 0.0
        %951 = vmatpush1.msra.mxu0 %v919
        %952 = vmatprep.subr.mxu0 0.0
        %953 = vmatpush1.msra.mxu0 0.0
        %954 = vmatprep.subr.mxu0 0.0
        %955 = vmatpush1.msra.mxu0 0.0
        %956 = vmatprep.subr.mxu0 0.0
        %957 = vmatpush1.msra.mxu0 0.0
        %958 = vmatprep.subr.mxu0 0.0
        %959 = vmatpush1.msra.mxu0 0.0
        %960 = vmatprep.subr.mxu0 0.0
        %961 = vmatpush1.msra.mxu0 0.0
        %962 = vmatprep.subr.mxu0 0.0
        %963 = vmatpush1.msra.mxu0 0.0
        %964 = vmatprep.subr.mxu0 0.0
        %965 = vmatpush1.msra.mxu0 0.0
        %966 = vmatprep.subr.mxu0 0.0
        %967 = vmatpush1.msra.mxu0 0.0
        %968 = vmatprep.subr.mxu0 0.0
        %969 = vmatpush1.msra.mxu0 0.0
        %970 = vmatprep.subr.mxu0 0.0
        %971 = vmatpush1.msra.mxu0 0.0
        %972 = vmatprep.subr.mxu0 0.0
        %973 = vmatpush1.msra.mxu0 0.0
        %974 = vmatprep.subr.mxu0 0.0
        %975 = vmatpush1.msra.mxu0 0.0
        %976 = vmatprep.subr.mxu0 0.0
        %977 = vmatpush1.msra.mxu0 0.0
        %978 = vmatprep.subr.mxu0 0.0
        %979 = vmatpush1.msra.mxu0 0.0
        %980 = vmatprep.subr.mxu0 0.0
        %981 = vmatpush1.msra.mxu0 0.0
        %982 = vmatprep.subr.mxu0 0.0
        %983 = vmatpush1.msra.mxu0 0.0
        %984 = vmatprep.mubr.f32.mxu0 0.0
        %985 = vmatmul.mubr.f32.gmra.mrb[0].mxu0 %v903
        %v986 = vpop.f32.mrb[0].mxu0
        %v987 = vadd.f32 0.0, %v986
        %v988 = vpop.f32.mrb[0].mxu0
        %989 = vdwg.mxu0
        %v990 = vmul.f32 %v987, 0.0009765625
        %v991 = vmul.f32 %v990, %v990
        %v993 = vrot.slane %v991, 7
        %v995 = vsub.f32 %v990, %v993
        %v996 = vmax.f32 %v995, 0.0
        %v997 = vadd.f32 %v996, 1e-05
        %v998 = vrsqrt.pop %v997
        %v999 = vld [vmem:[%s343] sm:$0x1]
        %v1001 = vlaneseq
        %v1002 = vshrl.u32 %v1001, 7
        %v1003 = vsub.s32 0, %v1002
        %v1004 = vrot.slane %v999, %v1003
        %v1006 = vmul.f32 %v998, %v1004
        %v1007 = vld [vmem:[%s346] sm:$0x1]
        %v1008 = vsub.f32 %v821, %v990
        %v1011 = vunpack.c.l.s4 1966171168
        %v1012 = vunpack.c.0.s8 %v1011
        %v1013 = vlaneseq
        %v1014 = vshrl.u32 %v1013, 7
        %v1015 = vsub.s32 %v1012, %v1014
        %v1016 = vrot.slane %v1006, %v1015
        %v1017 = vcombine.high %v1016, %v1016
        %v1019 = vunpack.c.l.s4 1966171168
        %v1020 = vunpack.c.0.s8 %v1019
        %v1021 = vlaneseq
        %v1022 = vshrl.u32 %v1021, 7
        %v1023 = vsub.s32 %v1020, %v1022
        %v1024 = vrot.slane %v1017, %v1023
        %v1026 = vmul.f32 %v1008, %v1024
        %v1027 = vadd.f32 %v1007, %v1026
        %v1028 = vlaneseq
        %v1029 = vshrl.u32 %v1028, 7
        %v1030 = vsub.s32 1, %v1029
        %v1031 = vrot.slane %v1006, %v1030
        %v1032 = vmul.f32 %v561, %v1031
        %v1033 = vmul.f32 %v566, %v1031
        %v1034 = vmul.f32 %v571, %v1031
        %v1035 = vmul.f32 %v576, %v1031
        %v1036 = vmul.f32 %v581, %v1031
        %v1037 = vmul.f32 %v586, %v1031
        %v1038 = vmul.f32 %v591, %v1031
        %v1039 = vmul.f32 %v596, %v1031
        %v1040 = vmul.f32 %v601, %v1031
        %v1041 = vmul.f32 %v606, %v1031
        %v1042 = vmul.f32 %v611, %v1031
        %v1043 = vmul.f32 %v616, %v1031
        %v1044 = vmul.f32 %v621, %v1031
        %v1045 = vmul.f32 %v626, %v1031
        %v1046 = vmul.f32 %v631, %v1031
        %v1047 = vmul.f32 %v636, %v1031
        %v1048 = vmul.f32 %v641, %v1031
        %v1049 = vmul.f32 %v646, %v1031
        %v1050 = vmul.f32 %v651, %v1031
        %v1051 = vmul.f32 %v656, %v1031
        %v1052 = vmul.f32 %v661, %v1031
        %v1053 = vmul.f32 %v666, %v1031
        %v1054 = vmul.f32 %v671, %v1031
        %v1055 = vmul.f32 %v676, %v1031
        %v1056 = vmul.f32 %v681, %v1031
        %v1057 = vmul.f32 %v686, %v1031
        %v1058 = vmul.f32 %v691, %v1031
        %v1059 = vmul.f32 %v696, %v1031
        %v1060 = vmul.f32 %v701, %v1031
        %v1061 = vmul.f32 %v706, %v1031
        %v1062 = vmul.f32 %v711, %v1031
        %v1063 = vmul.f32 %v716, %v1031
        %v1065 = vlaneseq
        %v1066 = vshrl.u32 %v1065, 7
        %v1067 = vsub.s32 0, %v1066
        %v1068 = vrot.slane %v1027, %v1067
        %v1070 = vadd.f32 %v1032, %v1068
        %v1071 = vadd.f32 %v1033, %v1068
        %v1072 = vadd.f32 %v1034, %v1068
        %v1073 = vadd.f32 %v1035, %v1068
        %v1074 = vadd.f32 %v1036, %v1068
        %v1075 = vadd.f32 %v1037, %v1068
        %v1076 = vadd.f32 %v1038, %v1068
        %v1077 = vadd.f32 %v1039, %v1068
        %v1078 = vadd.f32 %v1040, %v1068
        %v1079 = vadd.f32 %v1041, %v1068
        %v1080 = vadd.f32 %v1042, %v1068
        %v1081 = vadd.f32 %v1043, %v1068
        %v1082 = vadd.f32 %v1044, %v1068
        %v1083 = vadd.f32 %v1045, %v1068
        %v1084 = vadd.f32 %v1046, %v1068
        %v1085 = vadd.f32 %v1047, %v1068
        %v1086 = vadd.f32 %v1048, %v1068
        %v1087 = vadd.f32 %v1049, %v1068
        %v1088 = vadd.f32 %v1050, %v1068
        %v1089 = vadd.f32 %v1051, %v1068
        %v1090 = vadd.f32 %v1052, %v1068
        %v1091 = vadd.f32 %v1053, %v1068
        %v1092 = vadd.f32 %v1054, %v1068
        %v1093 = vadd.f32 %v1055, %v1068
        %v1094 = vadd.f32 %v1056, %v1068
        %v1095 = vadd.f32 %v1057, %v1068
        %v1096 = vadd.f32 %v1058, %v1068
        %v1097 = vadd.f32 %v1059, %v1068
        %v1098 = vadd.f32 %v1060, %v1068
        %v1099 = vadd.f32 %v1061, %v1068
        %v1100 = vadd.f32 %v1062, %v1068
        %v1101 = vadd.f32 %v1063, %v1068
        %vm1102 = vcmp.gt.f32.partialorder %v1070, 0.0
        %vm1103 = vcmp.gt.f32.partialorder %v1071, 0.0
        %vm1104 = vcmp.gt.f32.partialorder %v1072, 0.0
        %vm1105 = vcmp.gt.f32.partialorder %v1073, 0.0
        %vm1106 = vcmp.gt.f32.partialorder %v1074, 0.0
        %vm1107 = vcmp.gt.f32.partialorder %v1075, 0.0
        %vm1108 = vcmp.gt.f32.partialorder %v1076, 0.0
        %vm1109 = vcmp.gt.f32.partialorder %v1077, 0.0
        %vm1110 = vcmp.gt.f32.partialorder %v1078, 0.0
        %vm1111 = vcmp.gt.f32.partialorder %v1079, 0.0
        %vm1112 = vcmp.gt.f32.partialorder %v1080, 0.0
        %vm1113 = vcmp.gt.f32.partialorder %v1081, 0.0
        %vm1114 = vcmp.gt.f32.partialorder %v1082, 0.0
        %vm1115 = vcmp.gt.f32.partialorder %v1083, 0.0
        %vm1116 = vcmp.gt.f32.partialorder %v1084, 0.0
        %vm1117 = vcmp.gt.f32.partialorder %v1085, 0.0
        %vm1118 = vcmp.gt.f32.partialorder %v1086, 0.0
        %vm1119 = vcmp.gt.f32.partialorder %v1087, 0.0
        %vm1120 = vcmp.gt.f32.partialorder %v1088, 0.0
        %vm1121 = vcmp.gt.f32.partialorder %v1089, 0.0
        %vm1122 = vcmp.gt.f32.partialorder %v1090, 0.0
        %vm1123 = vcmp.gt.f32.partialorder %v1091, 0.0
        %vm1124 = vcmp.gt.f32.partialorder %v1092, 0.0
        %vm1125 = vcmp.gt.f32.partialorder %v1093, 0.0
        %vm1126 = vcmp.gt.f32.partialorder %v1094, 0.0
        %vm1127 = vcmp.gt.f32.partialorder %v1095, 0.0
        %vm1128 = vcmp.gt.f32.partialorder %v1096, 0.0
        %vm1129 = vcmp.gt.f32.partialorder %v1097, 0.0
        %vm1130 = vcmp.gt.f32.partialorder %v1098, 0.0
        %vm1131 = vcmp.gt.f32.partialorder %v1099, 0.0
        %vm1132 = vcmp.gt.f32.partialorder %v1100, 0.0
        %vm1133 = vcmp.gt.f32.partialorder %v1101, 0.0
        %v1134 = vmin.f32 %v1070, 0.0
        %v1135 = vmin.f32 %v1071, 0.0
        %v1136 = vmin.f32 %v1072, 0.0
        %v1137 = vmin.f32 %v1073, 0.0
        %v1138 = vmin.f32 %v1074, 0.0
        %v1139 = vmin.f32 %v1075, 0.0
        %v1140 = vmin.f32 %v1076, 0.0
        %v1141 = vmin.f32 %v1077, 0.0
        %v1142 = vmin.f32 %v1078, 0.0
        %v1143 = vmin.f32 %v1079, 0.0
        %v1144 = vmin.f32 %v1080, 0.0
        %v1145 = vmin.f32 %v1081, 0.0
        %v1146 = vmin.f32 %v1082, 0.0
        %v1147 = vmin.f32 %v1083, 0.0
        %v1148 = vmin.f32 %v1084, 0.0
        %v1149 = vmin.f32 %v1085, 0.0
        %v1150 = vmin.f32 %v1086, 0.0
        %v1151 = vmin.f32 %v1087, 0.0
        %v1152 = vmin.f32 %v1088, 0.0
        %v1153 = vmin.f32 %v1089, 0.0
        %v1154 = vmin.f32 %v1090, 0.0
        %v1155 = vmin.f32 %v1091, 0.0
        %v1156 = vmin.f32 %v1092, 0.0
        %v1157 = vmin.f32 %v1093, 0.0
        %v1158 = vmin.f32 %v1094, 0.0
        %v1159 = vmin.f32 %v1095, 0.0
        %v1160 = vmin.f32 %v1096, 0.0
        %v1161 = vmin.f32 %v1097, 0.0
        %v1162 = vmin.f32 %v1098, 0.0
        %v1163 = vmin.f32 %v1099, 0.0
        %v1164 = vmin.f32 %v1100, 0.0
        %v1165 = vmin.f32 %v1101, 0.0
        %v1166 = vmul.f32 %v1134, 1.442695
        %v1167 = vpow.pop %v1166
        %v1168 = vmul.f32 %v1135, 1.442695
        %v1169 = vpow.pop %v1168
        %v1170 = vmul.f32 %v1136, 1.442695
        %v1171 = vpow.pop %v1170
        %v1172 = vmul.f32 %v1137, 1.442695
        %v1173 = vpow.pop %v1172
        %v1174 = vmul.f32 %v1138, 1.442695
        %v1175 = vpow.pop %v1174
        %v1176 = vmul.f32 %v1139, 1.442695
        %v1177 = vpow.pop %v1176
        %v1178 = vmul.f32 %v1140, 1.442695
        %v1179 = vpow.pop %v1178
        %v1180 = vmul.f32 %v1141, 1.442695
        %v1181 = vpow.pop %v1180
        %v1182 = vmul.f32 %v1142, 1.442695
        %v1183 = vpow.pop %v1182
        %v1184 = vmul.f32 %v1143, 1.442695
        %v1185 = vpow.pop %v1184
        %v1186 = vmul.f32 %v1144, 1.442695
        %v1187 = vpow.pop %v1186
        %v1188 = vmul.f32 %v1145, 1.442695
        %v1189 = vpow.pop %v1188
        %v1190 = vmul.f32 %v1146, 1.442695
        %v1191 = vpow.pop %v1190
        %v1192 = vmul.f32 %v1147, 1.442695
        %v1193 = vpow.pop %v1192
        %v1194 = vmul.f32 %v1148, 1.442695
        %v1195 = vpow.pop %v1194
        %v1196 = vmul.f32 %v1149, 1.442695
        %v1197 = vpow.pop %v1196
        %v1198 = vmul.f32 %v1150, 1.442695
        %v1199 = vpow.pop %v1198
        %v1200 = vmul.f32 %v1151, 1.442695
        %v1201 = vpow.pop %v1200
        %v1202 = vmul.f32 %v1152, 1.442695
        %v1203 = vpow.pop %v1202
        %v1204 = vmul.f32 %v1153, 1.442695
        %v1205 = vpow.pop %v1204
        %v1206 = vmul.f32 %v1154, 1.442695
        %v1207 = vpow.pop %v1206
        %v1208 = vmul.f32 %v1155, 1.442695
        %v1209 = vpow.pop %v1208
        %v1210 = vmul.f32 %v1156, 1.442695
        %v1211 = vpow.pop %v1210
        %v1212 = vmul.f32 %v1157, 1.442695
        %v1213 = vpow.pop %v1212
        %v1214 = vmul.f32 %v1158, 1.442695
        %v1215 = vpow.pop %v1214
        %v1216 = vmul.f32 %v1159, 1.442695
        %v1217 = vpow.pop %v1216
        %v1218 = vmul.f32 %v1160, 1.442695
        %v1219 = vpow.pop %v1218
        %v1220 = vmul.f32 %v1161, 1.442695
        %v1221 = vpow.pop %v1220
        %v1222 = vmul.f32 %v1162, 1.442695
        %v1223 = vpow.pop %v1222
        %v1224 = vmul.f32 %v1163, 1.442695
        %v1225 = vpow.pop %v1224
        %v1226 = vmul.f32 %v1164, 1.442695
        %v1227 = vpow.pop %v1226
        %v1228 = vmul.f32 %v1165, 1.442695
        %v1229 = vpow.pop %v1228
        %v1230 = vsub.f32 %v1167, 1.0
        %v1231 = vsub.f32 %v1169, 1.0
        %v1232 = vsub.f32 %v1171, 1.0
        %v1233 = vsub.f32 %v1173, 1.0
        %v1234 = vsub.f32 %v1175, 1.0
        %v1235 = vsub.f32 %v1177, 1.0
        %v1236 = vsub.f32 %v1179, 1.0
        %v1237 = vsub.f32 %v1181, 1.0
        %v1238 = vsub.f32 %v1183, 1.0
        %v1239 = vsub.f32 %v1185, 1.0
        %v1240 = vsub.f32 %v1187, 1.0
        %v1241 = vsub.f32 %v1189, 1.0
        %v1242 = vsub.f32 %v1191, 1.0
        %v1243 = vsub.f32 %v1193, 1.0
        %v1244 = vsub.f32 %v1195, 1.0
        %v1245 = vsub.f32 %v1197, 1.0
        %v1246 = vsub.f32 %v1199, 1.0
        %v1247 = vsub.f32 %v1201, 1.0
        %v1248 = vsub.f32 %v1203, 1.0
        %v1249 = vsub.f32 %v1205, 1.0
        %v1250 = vsub.f32 %v1207, 1.0
        %v1251 = vsub.f32 %v1209, 1.0
        %v1252 = vsub.f32 %v1211, 1.0
        %v1253 = vsub.f32 %v1213, 1.0
        %v1254 = vsub.f32 %v1215, 1.0
        %v1255 = vsub.f32 %v1217, 1.0
        %v1256 = vsub.f32 %v1219, 1.0
        %v1257 = vsub.f32 %v1221, 1.0
        %v1258 = vsub.f32 %v1223, 1.0
        %v1259 = vsub.f32 %v1225, 1.0
        %v1260 = vsub.f32 %v1227, 1.0
        %v1261 = vsub.f32 %v1229, 1.0
        %v1262 = vsel %vm1102, %v1070, %v1230
        %v1263 = vsel %vm1103, %v1071, %v1231
        %v1264 = vsel %vm1104, %v1072, %v1232
        %v1265 = vsel %vm1105, %v1073, %v1233
        %v1266 = vsel %vm1106, %v1074, %v1234
        %v1267 = vsel %vm1107, %v1075, %v1235
        %v1268 = vsel %vm1108, %v1076, %v1236
        %v1269 = vsel %vm1109, %v1077, %v1237
        %v1270 = vsel %vm1110, %v1078, %v1238
        %v1271 = vsel %vm1111, %v1079, %v1239
        %v1272 = vsel %vm1112, %v1080, %v1240
        %v1273 = vsel %vm1113, %v1081, %v1241
        %v1274 = vsel %vm1114, %v1082, %v1242
        %v1275 = vsel %vm1115, %v1083, %v1243
        %v1276 = vsel %vm1116, %v1084, %v1244
        %v1277 = vsel %vm1117, %v1085, %v1245
        %v1278 = vsel %vm1118, %v1086, %v1246
        %v1279 = vsel %vm1119, %v1087, %v1247
        %v1280 = vsel %vm1120, %v1088, %v1248
        %v1281 = vsel %vm1121, %v1089, %v1249
        %v1282 = vsel %vm1122, %v1090, %v1250
        %v1283 = vsel %vm1123, %v1091, %v1251
        %v1284 = vsel %vm1124, %v1092, %v1252
        %v1285 = vsel %vm1125, %v1093, %v1253
        %v1286 = vsel %vm1126, %v1094, %v1254
        %v1287 = vsel %vm1127, %v1095, %v1255
        %v1288 = vsel %vm1128, %v1096, %v1256
        %v1289 = vsel %vm1129, %v1097, %v1257
        %v1290 = vsel %vm1130, %v1098, %v1258
        %v1291 = vsel %vm1131, %v1099, %v1259
        %v1292 = vsel %vm1132, %v1100, %v1260
        %v1293 = vsel %vm1133, %v1101, %v1261
        %1294 = vst [vmem:[%s328] sm:$0xff] %v1262
        %1295 = vst [vmem:[%s328 + $0x8] sm:$0xff] %v1263
        %1296 = vst [vmem:[%s328 + $0x10] sm:$0xff] %v1264
        %1297 = vst [vmem:[%s328 + $0x18] sm:$0xff] %v1265
        %1298 = vst [vmem:[%s328 + $0x20] sm:$0xff] %v1266
        %1299 = vst [vmem:[%s328 + $0x28] sm:$0xff] %v1267
        %1300 = vst [vmem:[%s328 + $0x30] sm:$0xff] %v1268
        %1301 = vst [vmem:[%s328 + $0x38] sm:$0xff] %v1269
        %1302 = vst [vmem:[%s328 + $0x40] sm:$0xff] %v1270
        %1303 = vst [vmem:[%s328 + $0x48] sm:$0xff] %v1271
        %1304 = vst [vmem:[%s328 + $0x50] sm:$0xff] %v1272
        %1305 = vst [vmem:[%s328 + $0x58] sm:$0xff] %v1273
        %1306 = vst [vmem:[%s328 + $0x60] sm:$0xff] %v1274
        %1307 = vst [vmem:[%s328 + $0x68] sm:$0xff] %v1275
        %1308 = vst [vmem:[%s328 + $0x70] sm:$0xff] %v1276
        %1309 = vst [vmem:[%s328 + $0x78] sm:$0xff] %v1277
        %1310 = vst [vmem:[%s328 + $0x80] sm:$0xff] %v1278
        %1311 = vst [vmem:[%s328 + $0x88] sm:$0xff] %v1279
        %1312 = vst [vmem:[%s328 + $0x90] sm:$0xff] %v1280
        %1313 = vst [vmem:[%s328 + $0x98] sm:$0xff] %v1281
        %1314 = vst [vmem:[%s328 + $0xa0] sm:$0xff] %v1282
        %1315 = vst [vmem:[%s328 + $0xa8] sm:$0xff] %v1283
        %1316 = vst [vmem:[%s328 + $0xb0] sm:$0xff] %v1284
        %1317 = vst [vmem:[%s328 + $0xb8] sm:$0xff] %v1285
        %1318 = vst [vmem:[%s328 + $0xc0] sm:$0xff] %v1286
        %1319 = vst [vmem:[%s328 + $0xc8] sm:$0xff] %v1287
        %1320 = vst [vmem:[%s328 + $0xd0] sm:$0xff] %v1288
        %1321 = vst [vmem:[%s328 + $0xd8] sm:$0xff] %v1289
        %1322 = vst [vmem:[%s328 + $0xe0] sm:$0xff] %v1290
        %1323 = vst [vmem:[%s328 + $0xe8] sm:$0xff] %v1291
        %1324 = vst [vmem:[%s328 + $0xf0] sm:$0xff] %v1292
        %1325 = vst [vmem:[%s328 + $0xf8] sm:$0xff] %v1293
        %s1326 = sand.u32 %s200, 1
        %s1327 = scalar_lea.sflag [#allocation3], %s1326
        %s1328 = sand.u32 %s200, 1
        %s1329 = smul.addr %s1328, 256
        %s1330 = scalar_lea.vmem [#allocation2], %s1329
        // Predicated region
        $region45: #{tpu_custom_call.1} parent=43 // pred_check
          %p1331 = pneg %p210
        $region46: #{tpu_custom_call.1} parent=43 // pred_check_branch
          %1333 = sbr.rel (%p1331) target = $region48
        $region47: #{tpu_custom_call.1} parent=43 // pred_region
          %s1335 = ssub.s32 4096, 4096
          %1336 = vsyncadd %s1327, %s1335
          %s1337 = smul.addr %s24, 32
          %s1338 = sadd.s32 %s25, %s1337
          %s1339 = smul.addr %s1338, 128
          %s1340 = scalar_lea.hbm %s6, %s1339
          %s1341 = sshll.u32 %s1330, 4
          %s1342 = int_to_ptr.vmem [resolvable:$true] %s1341
          %1347 = dma.vmem_to_hbm [thread:$0]  %s1342, 4096, %s1340, %s1327, 128, 128, 8
        $region48: #{tpu_custom_call.1} parent=43 // pred_fallthru
          _
      $region44: #{tpu_custom_call.1} parent=5 // pred_fallthru
        _
      %p1348 = scmp.le.s32.totalorder 2, %s15
      // Predicated region
      $region49: #{tpu_custom_call.1} parent=5 // pred_check
        %p1349 = pneg %p1348
      $region50: #{tpu_custom_call.1} parent=5 // pred_check_branch
        %1351 = sbr.rel (%p1349) target = $region52
      $region51: #{tpu_custom_call.1} parent=5 // pred_region
        %s1352 = ssub.s32 %s15, 2
        // Predicated region
        $region53: #{tpu_custom_call.1} parent=51 // pred_check
          %p1353 = pneg %p216
        $region54: #{tpu_custom_call.1} parent=51 // pred_check_branch
          %1355 = sbr.rel (%p1353) target = $region56
        $region55: #{tpu_custom_call.1} parent=51 // pred_region
          %s1356 = sand.u32 %s201, 1
          %s1357 = scalar_lea.sflag [#allocation3], %s1356
          %s1358 = sand.u32 %s201, 1
          %s1359 = smul.addr %s1358, 256
          %s1360 = scalar_lea.vmem [#allocation2], %s1359
          %1361 = dma.done %s1357, 4096
        $region56: #{tpu_custom_call.1} parent=51 // pred_fallthru
          _
      $region52: #{tpu_custom_call.1} parent=5 // pred_fallthru
        _
    $region6: #{tpu_custom_call.1} parent=1 // loop_footer
      %s19 = sadd.s32 1, %s15
    $region7: #{tpu_custom_call.1} parent=1 // loop_footer_branch
      %14 = sbr.rel target = $region3
    $region8: #{tpu_custom_call.1} parent=1 // loop_exit
      _
    %1362 = vsyncpa [#allocation3], 1
    %s1363 = scalar_lea.sflag [#allocation3], 1
    %1364 = vsyncpa %s1363, 1

// kernel: tpu_custom_call.1
$region0: #{tpu_custom_call.1}
  #allocation0 [shape = 'u32[]', space=smem, size = 0x4, offset = 0x4, fixed_abs, tag = 'smem constant byte address 0x4 - core index']
  #allocation1 [shape = 'u32[144,128]{1,0:T(1,128)}', space=vmem, size = 0x12000, scoped, tag = 'internal scratch']
  %s0 = inlined_call_operand.vmem [shape: f32[2,256,36], index: 0, kind: input, shape index: {}]
  %s1 = inlined_call_operand.vmem [shape: f32[1,36,128], index: 1, kind: input, shape index: {}]
  %s2 = inlined_call_operand.vmem [shape: f32[1,128], index: 2, kind: input, shape index: {}]
  %s3 = inlined_call_operand.vmem [shape: f32[1,128], index: 3, kind: input, shape index: {}]
  %s4 = inlined_call_operand.vmem [shape: f32[1,128], index: 4, kind: input, shape index: {}]
  %s5 = inlined_call_operand.vmem [shape: f32[128,128], index: 5, kind: input, shape index: {}]
  %s6 = inlined_call_operand.hbm [shape: f32[2,256,128], index: 6, kind: output, shape index: {}]
  %s7 = sld [smem:[#allocation0]]
  $region57: #{tpu_custom_call.1} parent=0
    _
  %s9 = ssub.s32 1, %s7
  %s10 = scalar_select 0, %s9, %s7
  $region1: #{tpu_custom_call.1} parent=0
    #allocation2 [shape = 'u8[262144]{0}', space=vmem, size = 0x40000, scoped, tag = 'output window, operand 0']
    #allocation3 [shape = 's32[2]{0}', space=sflag, size = 0x8, scoped, tag = 'scoped memory for tpu_custom_call.1']
    %11 = vsyncpa [#allocation3], 0
    %s12 = scalar_lea.sflag [#allocation3], 1
    %13 = vsyncpa %s12, 0
    loop: start=0, step=1, limit=4
    $region2: #{tpu_custom_call.1} parent=1 // loop_pre_header
      _
    $region3: #{tpu_custom_call.1} parent=1 // loop_header
      %s15 = sphi 0, %s19
      %p16 = scmp.ge.s32.totalorder %s15, 4
      %s22 = sphi 0, %s34
      %s23 = sphi 0, %s30
      %s24 = sphi 0, %s22
      %s25 = sphi 0, %s23
      %s26 = sphi 0, %s24
      %s27 = sphi 0, %s25
      %s37 = sphi 0, %s39
      %s40 = sphi 0, %s37
      %s41 = sphi 0, %s40
      %s57 = sphi 0, %s41
      %s63 = sphi 0, %s65
      %s66 = sphi 0, %s63
      %s67 = sphi 0, %s66
      %s83 = sphi 0, %s67
      %s89 = sphi 0, %s91
      %s92 = sphi 0, %s89
      %s93 = sphi 0, %s92
      %s109 = sphi 0, %s93
      %s115 = sphi 0, %s117
      %s118 = sphi 0, %s115
      %s119 = sphi 0, %s118
      %s135 = sphi 0, %s119
      %s141 = sphi 0, %s143
      %s144 = sphi 0, %s141
      %s145 = sphi 0, %s144
      %s161 = sphi 0, %s145
      %s169 = sphi 0, %s171
      %s172 = sphi 0, %s169
      %s173 = sphi 0, %s172
      %s189 = sphi 0, %s173
      %s197 = sphi 0, %s199
      %s200 = sphi 0, %s197
      %s201 = sphi 0, %s200
      %s217 = sphi 0, %s201
    $region4: #{tpu_custom_call.1} parent=1 // loop_header_branch
      %18 = sbr.rel (%p16) target = $region8
    $region5: #{tpu_custom_call.1} parent=1 // loop_body
      %s20 = ssub.s32 %s15, 1
      %s21 = ssub.s32 %s15, 2
      %s28 = sadd.s32 1, %s23
      %p29 = scmp.ge.s32.totalorder %s28, 1
      %s30 = scalar_select %p29, 0, %s28
      %s31 = sadd.s32 1, %s22
      %s32 = scalar_select %p29, %s31, %s22
      %p33 = scmp.ge.s32.totalorder %s32, 2
      %s34 = scalar_select %p33, 0, %s32
      %s35 = ssub.s32 %s22, %s34
      %p36 = scmp.eq.s32.totalorder %s35, 0
      %s38 = sadd.s32 %s37, 1
      %s39 = scalar_select %p36, %s37, %s38
      %p42 = pneg %p36
      %p43 = scmp.eq.s32.totalorder %s15, 1
      %p44 = por %p42, %p43
      %p45 = scmp.ne.s32.totalorder %s37, %s40
      %p46 = scmp.eq.s32.totalorder %s15, 0
      %p47 = por %p45, %p46
      %p48 = scmp.ne.s32.totalorder %s37, %s40
      %p49 = scmp.eq.s32.totalorder %s20, 1
      %p50 = por %p48, %p49
      %p51 = scmp.ne.s32.totalorder %s40, %s41
      %p52 = scmp.eq.s32.totalorder %s20, 0
      %p53 = por %p51, %p52
      %p54 = scmp.ne.s32.totalorder %s40, %s41
      %p55 = scmp.eq.s32.totalorder %s21, 1
      %p56 = por %p54, %p55
      %p58 = scmp.ne.s32.totalorder %s41, %s57
      %p59 = scmp.eq.s32.totalorder %s21, 0
      %p60 = por %p58, %p59
      %s61 = ssub.s32 %s23, %s30
      %p62 = scmp.eq.s32.totalorder %s61, 0
      %s64 = sadd.s32 %s63, 1
      %s65 = scalar_select %p62, %s63, %s64
      %p68 = pneg %p62
      %p69 = scmp.eq.s32.totalorder %s15, 1
      %p70 = por %p68, %p69
      %p71 = scmp.ne.s32.totalorder %s63, %s66
      %p72 = scmp.eq.s32.totalorder %s15, 0
      %p73 = por %p71, %p72
      %p74 = scmp.ne.s32.totalorder %s63, %s66
      %p75 = scmp.eq.s32.totalorder %s20, 1
      %p76 = por %p74, %p75
      %p77 = scmp.ne.s32.totalorder %s66, %s67
      %p78 = scmp.eq.s32.totalorder %s20, 0
      %p79 = por %p77, %p78
      %p80 = scmp.ne.s32.totalorder %s66, %s67
      %p81 = scmp.eq.s32.totalorder %s21, 1
      %p82 = por %p80, %p81
      %p84 = scmp.ne.s32.totalorder %s67, %s83
      %p85 = scmp.eq.s32.totalorder %s21, 0
      %p86 = por %p84, %p85
      %s87 = ssub.s32 %s23, %s30
      %p88 = scmp.eq.s32.totalorder %s87, 0
      %s90 = sadd.s32 %s89, 1
      %s91 = scalar_select %p88, %s89, %s90
      %p94 = pneg %p88
      %p95 = scmp.eq.s32.totalorder %s15, 1
      %p96 = por %p94, %p95
      %p97 = scmp.ne.s32.totalorder %s89, %s92
      %p98 = scmp.eq.s32.totalorder %s15, 0
      %p99 = por %p97, %p98
      %p100 = scmp.ne.s32.totalorder %s89, %s92
      %p101 = scmp.eq.s32.totalorder %s20, 1
      %p102 = por %p100, %p101
      %p103 = scmp.ne.s32.totalorder %s92, %s93
      %p104 = scmp.eq.s32.totalorder %s20, 0
      %p105 = por %p103, %p104
      %p106 = scmp.ne.s32.totalorder %s92, %s93
      %p107 = scmp.eq.s32.totalorder %s21, 1
      %p108 = por %p106, %p107
      %p110 = scmp.ne.s32.totalorder %s93, %s109
      %p111 = scmp.eq.s32.totalorder %s21, 0
      %p112 = por %p110, %p111
      %s113 = ssub.s32 %s23, %s30
      %p114 = scmp.eq.s32.totalorder %s113, 0
      %s116 = sadd.s32 %s115, 1
      %s117 = scalar_select %p114, %s115, %s116
      %p120 = pneg %p114
      %p121 = scmp.eq.s32.totalorder %s15, 1
      %p122 = por %p120, %p121
      %p123 = scmp.ne.s32.totalorder %s115, %s118
      %p124 = scmp.eq.s32.totalorder %s15, 0
      %p125 = por %p123, %p124
      %p126 = scmp.ne.s32.totalorder %s115, %s118
      %p127 = scmp.eq.s32.totalorder %s20, 1
      %p128 = por %p126, %p127
      %p129 = scmp.ne.s32.totalorder %s118, %s119
      %p130 = scmp.eq.s32.totalorder %s20, 0
      %p131 = por %p129, %p130
      %p132 = scmp.ne.s32.totalorder %s118, %s119
      %p133 = scmp.eq.s32.totalorder %s21, 1
      %p134 = por %p132, %p133
      %p136 = scmp.ne.s32.totalorder %s119, %s135
      %p137 = scmp.eq.s32.totalorder %s21, 0
      %p138 = por %p136, %p137
      %s139 = ssub.s32 %s23, %s30
      %p140 = scmp.eq.s32.totalorder %s139, 0
      %s142 = sadd.s32 %s141, 1
      %s143 = scalar_select %p140, %s141, %s142
      %p146 = pneg %p140
      %p147 = scmp.eq.s32.totalorder %s15, 1
      %p148 = por %p146, %p147
      %p149 = scmp.ne.s32.totalorder %s141, %s144
      %p150 = scmp.eq.s32.totalorder %s15, 0
      %p151 = por %p149, %p150
      %p152 = scmp.ne.s32.totalorder %s141, %s144
      %p153 = scmp.eq.s32.totalorder %s20, 1
      %p154 = por %p152, %p153
      %p155 = scmp.ne.s32.totalorder %s144, %s145
      %p156 = scmp.eq.s32.totalorder %s20, 0
      %p157 = por %p155, %p156
      %p158 = scmp.ne.s32.totalorder %s144, %s145
      %p159 = scmp.eq.s32.totalorder %s21, 1
      %p160 = por %p158, %p159
      %p162 = scmp.ne.s32.totalorder %s145, %s161
      %p163 = scmp.eq.s32.totalorder %s21, 0
      %p164 = por %p162, %p163
      %s165 = ssub.s32 %s23, %s30
      %s166 = ssub.s32 %s23, %s30
      %s167 = sor.u32 %s165, %s166
      %p168 = scmp.eq.s32.totalorder %s167, 0
      %s170 = sadd.s32 %s169, 1
      %s171 = scalar_select %p168, %s169, %s170
      %p174 = pneg %p168
      %p175 = scmp.eq.s32.totalorder %s15, 1
      %p176 = por %p174, %p175
      %p177 = scmp.ne.s32.totalorder %s169, %s172
      %p178 = scmp.eq.s32.totalorder %s15, 0
      %p179 = por %p177, %p178
      %p180 = scmp.ne.s32.totalorder %s169, %s172
      %p181 = scmp.eq.s32.totalorder %s20, 1
      %p182 = por %p180, %p181
      %p183 = scmp.ne.s32.totalorder %s172, %s173
      %p184 = scmp.eq.s32.totalorder %s20, 0
      %p185 = por %p183, %p184
      %p186 = scmp.ne.s32.totalorder %s172, %s173
      %p187 = scmp.eq.s32.totalorder %s21, 1
      %p188 = por %p186, %p187
      %p190 = scmp.ne.s32.totalorder %s173, %s189
      %p191 = scmp.eq.s32.totalorder %s21, 0
      %p192 = por %p190, %p191
      %s193 = ssub.s32 %s22, %s34
      %s194 = ssub.s32 %s23, %s30
      %s195 = sor.u32 %s193, %s194
      %p196 = scmp.eq.s32.totalorder %s195, 0
      %s198 = sadd.s32 %s197, 1
      %s199 = scalar_select %p196, %s197, %s198
      %p202 = pneg %p196
      %p203 = scmp.eq.s32.totalorder %s15, 1
      %p204 = por %p202, %p203
      %p205 = scmp.ne.s32.totalorder %s197, %s200
      %p206 = scmp.eq.s32.totalorder %s15, 0
      %p207 = por %p205, %p206
      %p208 = scmp.ne.s32.totalorder %s197, %s200
      %p209 = scmp.eq.s32.totalorder %s20, 1
      %p210 = por %p208, %p209
      %p211 = scmp.ne.s32.totalorder %s200, %s201
      %p212 = scmp.eq.s32.totalorder %s20, 0
      %p213 = por %p211, %p212
      %p214 = scmp.ne.s32.totalorder %s200, %s201
      %p215 = scmp.eq.s32.totalorder %s21, 1
      %p216 = por %p214, %p215
      %p218 = scmp.ne.s32.totalorder %s201, %s217
      %p219 = scmp.eq.s32.totalorder %s21, 0
      %p220 = por %p218, %p219
      %p221 = scmp.le.s32.totalorder 1, %s15
      %p222 = scmp.lt.s32.totalorder %s15, 3
      %p223 = pnand %p221, %p222
      %p224 = pneg %p223
      // Predicated region
      $region9: #{tpu_custom_call.1} parent=5 // pred_check
        _
      $region10: #{tpu_custom_call.1} parent=5 // pred_check_branch
        %226 = sbr.rel (%p223) target = $region12
      $region11: #{tpu_custom_call.1} parent=5 // pred_region
        %s227 = ssub.s32 %s15, 1
        // Predicated region
        $region13: #{tpu_custom_call.1} parent=11 // pred_check
          %p228 = pneg %p79
        $region14: #{tpu_custom_call.1} parent=11 // pred_check_branch
          %230 = sbr.rel (%p228) target = $region16
        $region15: #{tpu_custom_call.1} parent=11 // pred_region
          %p231 = scmp.lt.s32.totalorder %s25, 0
          %s232 = scalar_select %p231, %s25, 0
          %s233 = smul.addr %s232, 8
          %s234 = scalar_lea.vmem %s1, %s233
        $region16: #{tpu_custom_call.1} parent=11 // pred_fallthru
          _
        // Predicated region
        $region17: #{tpu_custom_call.1} parent=11 // pred_check
          %p235 = pneg %p105
        $region18: #{tpu_custom_call.1} parent=11 // pred_check_branch
          %237 = sbr.rel (%p235) target = $region20
        $region19: #{tpu_custom_call.1} parent=11 // pred_region
          %p238 = scmp.lt.s32.totalorder %s25, 0
          %s239 = scalar_select %p238, %s25, 0
          %s240 = scalar_lea.vmem %s2, %s239
        $region20: #{tpu_custom_call.1} parent=11 // pred_fallthru
          _
        // Predicated region
        $region21: #{tpu_custom_call.1} parent=11 // pred_check
          %p241 = pneg %p131
        $region22: #{tpu_custom_call.1} parent=11 // pred_check_branch
          %243 = sbr.rel (%p241) target = $region24
        $region23: #{tpu_custom_call.1} parent=11 // pred_region
          %p244 = scmp.lt.s32.totalorder %s25, 0
          %s245 = scalar_select %p244, %s25, 0
          %s246 = scalar_lea.vmem %s3, %s245
        $region24: #{tpu_custom_call.1} parent=11 // pred_fallthru
          _
        // Predicated region
        $region25: #{tpu_custom_call.1} parent=11 // pred_check
          %p247 = pneg %p157
        $region26: #{tpu_custom_call.1} parent=11 // pred_check_branch
          %249 = sbr.rel (%p247) target = $region28
        $region27: #{tpu_custom_call.1} parent=11 // pred_region
          %p250 = scmp.lt.s32.totalorder %s25, 0
          %s251 = scalar_select %p250, %s25, 0
          %s252 = scalar_lea.vmem %s4, %s251
        $region28: #{tpu_custom_call.1} parent=11 // pred_fallthru
          _
        // Predicated region
        $region29: #{tpu_custom_call.1} parent=11 // pred_check
          %p253 = pneg %p185
        $region30: #{tpu_custom_call.1} parent=11 // pred_check_branch
          %255 = sbr.rel (%p253) target = $region32
        $region31: #{tpu_custom_call.1} parent=11 // pred_region
          %s256 = smul.u32 16, %s25
          %p257 = scmp.lt.s32.totalorder %s256, 15
          %s258 = scalar_select %p257, %s256, 15
          %p259 = scmp.lt.s32.totalorder %s25, 0
          %s260 = scalar_select %p259, %s25, 0
          %s261 = sadd.s32 %s260, %s258
          %s262 = smul.addr %s261, 8
          %s263 = scalar_lea.vmem %s5, %s262
          %s264 = smul.u32 16, %s25
        $region32: #{tpu_custom_call.1} parent=11 // pred_fallthru
          _
      $region12: #{tpu_custom_call.1} parent=5 // pred_fallthru
        _
      %p265 = scmp.lt.s32.totalorder %s15, 2
      // Predicated region
      $region33: #{tpu_custom_call.1} parent=5 // pred_check
        %p266 = pneg %p265
      $region34: #{tpu_custom_call.1} parent=5 // pred_check_branch
        %268 = sbr.rel (%p266) target = $region36
      $region35: #{tpu_custom_call.1} parent=5 // pred_region
        // Predicated region
        $region37: #{tpu_custom_call.1} parent=35 // pred_check
          %p269 = pneg %p47
        $region38: #{tpu_custom_call.1} parent=35 // pred_check_branch
          %271 = sbr.rel (%p269) target = $region40
        $region39: #{tpu_custom_call.1} parent=35 // pred_region
          %p272 = scmp.lt.s32.totalorder %s22, 1
          %s273 = scalar_select %p272, %s22, 1
          %s274 = smul.addr %s273, 32
          %s275 = smul.addr %s274, 8
          %s276 = scalar_lea.vmem %s0, %s275
        $region40: #{tpu_custom_call.1} parent=35 // pred_fallthru
          _
      $region36: #{tpu_custom_call.1} parent=5 // pred_fallthru
        _
      %p277 = scmp.le.s32.totalorder 1, %s15
      %p278 = scmp.lt.s32.totalorder %s15, 3
      %p279 = pnand %p277, %p278
      %p280 = pneg %p279
      // Predicated region
      $region41: #{tpu_custom_call.1} parent=5 // pred_check
        _
      $region42: #{tpu_custom_call.1} parent=5 // pred_check_branch
        %282 = sbr.rel (%p279) target = $region44
      $region43: #{tpu_custom_call.1} parent=5 // pred_region
        %s283 = ssub.s32 %s15, 1
        %p284 = scmp.lt.s32.totalorder %s24, 1
        %s285 = scalar_select %p284, %s24, 1
        %s286 = smul.addr %s285, 32
        %s287 = smul.addr %s286, 8
        %s288 = scalar_lea.vmem %s0, %s287
        %p289 = pneg %p53
        %p290 = pneg %p50
        %p291 = scmp.lt.s32.totalorder %s25, 0
        %s292 = scalar_select %p291, %s25, 0
        %s293 = smul.addr %s292, 8
        %s294 = scalar_lea.vmem %s1, %s293
        %p295 = pneg %p79
        %p296 = pneg %p76
        %p297 = scmp.lt.s32.totalorder %s25, 0
        %s298 = scalar_select %p297, %s25, 0
        %s299 = scalar_lea.vmem %s2, %s298
        %p300 = pneg %p105
        %p301 = pneg %p102
        %p302 = scmp.lt.s32.totalorder %s25, 0
        %s303 = scalar_select %p302, %s25, 0
        %s304 = scalar_lea.vmem %s3, %s303
        %p305 = pneg %p131
        %p306 = pneg %p128
        %p307 = scmp.lt.s32.totalorder %s25, 0
        %s308 = scalar_select %p307, %s25, 0
        %s309 = scalar_lea.vmem %s4, %s308
        %p310 = pneg %p157
        %p311 = pneg %p154
        %s312 = smul.u32 16, %s25
        %p313 = scmp.lt.s32.totalorder %s312, 15
        %s314 = scalar_select %p313, %s312, 15
        %p315 = scmp.lt.s32.totalorder %s25, 0
        %s316 = scalar_select %p315, %s25, 0
        %s317 = sadd.s32 %s316, %s314
        %s318 = smul.addr %s317, 8
        %s319 = scalar_lea.vmem %s5, %s318
        %p320 = pneg %p185
        %p321 = pneg %p182
        %p322 = pneg %p213
        %p323 = pneg %p210
        %s324 = sand.u32 %s200, 1
        %s325 = scalar_lea.sflag [#allocation3], %s324
        %s326 = sand.u32 %s200, 1
        %s327 = smul.addr %s326, 256
        %s328 = scalar_lea.vmem [#allocation2], %s327
        %p329 = scmp.lt.s32.totalorder %s24, 1
        %s330 = scalar_select %p329, %s24, 1
        %s331 = smul.addr %s330, 32
        %s332 = smul.addr %s331, 8
        %s333 = scalar_lea.vmem %s0, %s332
        %p334 = scmp.lt.s32.totalorder %s25, 0
        %s335 = scalar_select %p334, %s25, 0
        %s336 = smul.addr %s335, 8
        %s337 = scalar_lea.vmem %s1, %s336
        %p338 = scmp.lt.s32.totalorder %s25, 0
        %s339 = scalar_select %p338, %s25, 0
        %s340 = scalar_lea.vmem %s2, %s339
        %p341 = scmp.lt.s32.totalorder %s25, 0
        %s342 = scalar_select %p341, %s25, 0
        %s343 = scalar_lea.vmem %s3, %s342
        %p344 = scmp.lt.s32.totalorder %s25, 0
        %s345 = scalar_select %p344, %s25, 0
        %s346 = scalar_lea.vmem %s4, %s345
        %s347 = smul.u32 16, %s25
        %p348 = scmp.lt.s32.totalorder %s347, 15
        %s349 = scalar_select %p348, %s347, 15
        %p350 = scmp.lt.s32.totalorder %s25, 0
        %s351 = scalar_select %p350, %s25, 0
        %s352 = sadd.s32 %s351, %s349
        %s353 = smul.addr %s352, 8
        %s354 = scalar_lea.vmem %s5, %s353
        %s355 = smul.u32 16, %s25
        %v356 = vld [vmem:[%s333] sm:$0xff]
        %v357 = vld [vmem:[%s333 + $0x8] sm:$0xff]
        %v358 = vld [vmem:[%s333 + $0x10] sm:$0xff]
        %v359 = vld [vmem:[%s333 + $0x18] sm:$0xff]
        %v360 = vld [vmem:[%s333 + $0x20] sm:$0xff]
        %v361 = vld [vmem:[%s333 + $0x28] sm:$0xff]
        %v362 = vld [vmem:[%s333 + $0x30] sm:$0xff]
        %v363 = vld [vmem:[%s333 + $0x38] sm:$0xff]
        %v364 = vld [vmem:[%s333 + $0x40] sm:$0xff]
        %v365 = vld [vmem:[%s333 + $0x48] sm:$0xff]
        %v366 = vld [vmem:[%s333 + $0x50] sm:$0xff]
        %v367 = vld [vmem:[%s333 + $0x58] sm:$0xff]
        %v368 = vld [vmem:[%s333 + $0x60] sm:$0xff]
        %v369 = vld [vmem:[%s333 + $0x68] sm:$0xff]
        %v370 = vld [vmem:[%s333 + $0x70] sm:$0xff]
        %v371 = vld [vmem:[%s333 + $0x78] sm:$0xff]
        %v372 = vld [vmem:[%s333 + $0x80] sm:$0xff]
        %v373 = vld [vmem:[%s333 + $0x88] sm:$0xff]
        %v374 = vld [vmem:[%s333 + $0x90] sm:$0xff]
        %v375 = vld [vmem:[%s333 + $0x98] sm:$0xff]
        %v376 = vld [vmem:[%s333 + $0xa0] sm:$0xff]
        %v377 = vld [vmem:[%s333 + $0xa8] sm:$0xff]
        %v378 = vld [vmem:[%s333 + $0xb0] sm:$0xff]
        %v379 = vld [vmem:[%s333 + $0xb8] sm:$0xff]
        %v380 = vld [vmem:[%s333 + $0xc0] sm:$0xff]
        %v381 = vld [vmem:[%s333 + $0xc8] sm:$0xff]
        %v382 = vld [vmem:[%s333 + $0xd0] sm:$0xff]
        %v383 = vld [vmem:[%s333 + $0xd8] sm:$0xff]
        %v384 = vld [vmem:[%s333 + $0xe0] sm:$0xff]
        %v385 = vld [vmem:[%s333 + $0xe8] sm:$0xff]
        %v386 = vld [vmem:[%s333 + $0xf0] sm:$0xff]
        %v387 = vld [vmem:[%s333 + $0xf8] sm:$0xff]
        %v388 = vld [vmem:[%s337] sm:$0xff]
        %v389 = vld [vmem:[%s337 + $0x8] sm:$0xff]
        %v390 = vld [vmem:[%s337 + $0x10] sm:$0xff]
        %v391 = vld [vmem:[%s337 + $0x18] sm:$0xff]
        %v392 = vld [vmem:[%s337 + $0x20] sm:$0xf]
        %vm393 = vcmask 293888
        %v395 = vsel %vm393, %v356, 0
        %v398 = vsel %vm393, %v357, 0
        %v401 = vsel %vm393, %v358, 0
        %v404 = vsel %vm393, %v359, 0
        %v407 = vsel %vm393, %v360, 0
        %v410 = vsel %vm393, %v361, 0
        %v413 = vsel %vm393, %v362, 0
        %v416 = vsel %vm393, %v363, 0
        %v419 = vsel %vm393, %v364, 0
        %v422 = vsel %vm393, %v365, 0
        %v425 = vsel %vm393, %v366, 0
        %v428 = vsel %vm393, %v367, 0
        %v431 = vsel %vm393, %v368, 0
        %v434 = vsel %vm393, %v369, 0
        %v437 = vsel %vm393, %v370, 0
        %v440 = vsel %vm393, %v371, 0
        %v443 = vsel %vm393, %v372, 0
        %v446 = vsel %vm393, %v373, 0
        %v449 = vsel %vm393, %v374, 0
        %v452 = vsel %vm393, %v375, 0
        %v455 = vsel %vm393, %v376, 0
        %v458 = vsel %vm393, %v377, 0
        %v461 = vsel %vm393, %v378, 0
        %v464 = vsel %vm393, %v379, 0
        %v467 = vsel %vm393, %v380, 0
        %v470 = vsel %vm393, %v381, 0
        %v473 = vsel %vm393, %v382, 0
        %v476 = vsel %vm393, %v383, 0
        %v479 = vsel %vm393, %v384, 0
        %v482 = vsel %vm393, %v385, 0
        %v485 = vsel %vm393, %v386, 0
        %v488 = vsel %vm393, %v387, 0
        %vm490 = vcmask 1043456
        %v492 = vsel %vm490, %v392, 0
        %494 = vmatprep.subr.mxu0 0.0
        %495 = vmatpush1.msra.mxu0 %v388
        %496 = vmatprep.subr.mxu0 0.0
        %497 = vmatpush1.msra.mxu0 %v389
        %498 = vmatprep.subr.mxu0 0.0
        %499 = vmatpush1.msra.mxu0 %v390
        %500 = vmatprep.subr.mxu0 0.0
        %501 = vmatpush1.msra.mxu0 %v391
        %502 = vmatprep.subr.mxu0 0.0
        %503 = vmatpush1.msra.mxu0 %v492
        %504 = vmatprep.subr.mxu0 0.0
        %505 = vmatpush1.msra.mxu0 0.0
        %506 = vmatprep.subr.mxu0 0.0
        %507 = vmatpush1.msra.mxu0 0.0
        %508 = vmatprep.subr.mxu0 0.0
        %509 = vmatpush1.msra.mxu0 0.0
        %510 = vmatprep.subr.mxu0 0.0
        %511 = vmatpush1.msra.mxu0 0.0
        %512 = vmatprep.subr.mxu0 0.0
        %513 = vmatpush1.msra.mxu0 0.0
        %514 = vmatprep.subr.mxu0 0.0
        %515 = vmatpush1.msra.mxu0 0.0
        %516 = vmatprep.subr.mxu0 0.0
        %517 = vmatpush1.msra.mxu0 0.0
        %518 = vmatprep.subr.mxu0 0.0
        %519 = vmatpush1.msra.mxu0 0.0
        %520 = vmatprep.subr.mxu0 0.0
        %521 = vmatpush1.msra.mxu0 0.0
        %522 = vmatprep.subr.mxu0 0.0
        %523 = vmatpush1.msra.mxu0 0.0
        %524 = vmatprep.subr.mxu0 0.0
        %525 = vmatpush1.msra.mxu0 0.0
        %526 = vmatprep.subr.mxu0 0.0
        %527 = vmatpush1.msra.mxu0 0.0
        %528 = vmatprep.subr.mxu0 0.0
        %529 = vmatpush1.msra.mxu0 0.0
        %530 = vmatprep.subr.mxu0 0.0
        %531 = vmatpush1.msra.mxu0 0.0
        %532 = vmatprep.subr.mxu0 0.0
        %533 = vmatpush1.msra.mxu0 0.0
        %534 = vmatprep.subr.mxu0 0.0
        %535 = vmatpush1.msra.mxu0 0.0
        %536 = vmatprep.subr.mxu0 0.0
        %537 = vmatpush1.msra.mxu0 0.0
        %538 = vmatprep.subr.mxu0 0.0
        %539 = vmatpush1.msra.mxu0 0.0
        %540 = vmatprep.subr.mxu0 0.0
        %541 = vmatpush1.msra.mxu0 0.0
        %542 = vmatprep.subr.mxu0 0.0
        %543 = vmatpush1.msra.mxu0 0.0
        %544 = vmatprep.subr.mxu0 0.0
        %545 = vmatpush1.msra.mxu0 0.0
        %546 = vmatprep.subr.mxu0 0.0
        %547 = vmatpush1.msra.mxu0 0.0
        %548 = vmatprep.subr.mxu0 0.0
        %549 = vmatpush1.msra.mxu0 0.0
        %550 = vmatprep.subr.mxu0 0.0
        %551 = vmatpush1.msra.mxu0 0.0
        %552 = vmatprep.subr.mxu0 0.0
        %553 = vmatpush1.msra.mxu0 0.0
        %554 = vmatprep.subr.mxu0 0.0
        %555 = vmatpush1.msra.mxu0 0.0
        %556 = vmatprep.subr.mxu0 0.0
        %557 = vmatpush1.msra.mxu0 0.0
        %558 = vmatprep.mubr.f32.mxu0 0.0
        %559 = vmatmul.mubr.f32.gmra.mrb[0].mxu0 %v395
        %v560 = vpop.f32.mrb[0].mxu0
        %v561 = vadd.f32 0.0, %v560
        %v562 = vpop.f32.mrb[0].mxu0
        %563 = vmatprep.mubr.f32.mxu0 0.0
        %564 = vmatmul.mubr.f32.gmra.mrb[0].mxu0 %v398
        %v565 = vpop.f32.mrb[0].mxu0
        %v566 = vadd.f32 0.0, %v565
        %v567 = vpop.f32.mrb[0].mxu0
        %568 = vmatprep.mubr.f32.mxu0 0.0
        %569 = vmatmul.mubr.f32.gmra.mrb[0].mxu0 %v401
        %v570 = vpop.f32.mrb[0].mxu0
        %v571 = vadd.f32 0.0, %v570
        %v572 = vpop.f32.mrb[0].mxu0
        %573 = vmatprep.mubr.f32.mxu0 0.0
        %574 = vmatmul.mubr.f32.gmra.mrb[0].mxu0 %v404
        %v575 = vpop.f32.mrb[0].mxu0
        %v576 = vadd.f32 0.0, %v575
        %v577 = vpop.f32.mrb[0].mxu0
        %578 = vmatprep.mubr.f32.mxu0 0.0
        %579 = vmatmul.mubr.f32.gmra.mrb[0].mxu0 %v407
        %v580 = vpop.f32.mrb[0].mxu0
        %v581 = vadd.f32 0.0, %v580
        %v582 = vpop.f32.mrb[0].mxu0
        %583 = vmatprep.mubr.f32.mxu0 0.0
        %584 = vmatmul.mubr.f32.gmra.mrb[0].mxu0 %v410
        %v585 = vpop.f32.mrb[0].mxu0
        %v586 = vadd.f32 0.0, %v585
        %v587 = vpop.f32.mrb[0].mxu0
        %588 = vmatprep.mubr.f32.mxu0 0.0
        %589 = vmatmul.mubr.f32.gmra.mrb[0].mxu0 %v413
        %v590 = vpop.f32.mrb[0].mxu0
        %v591 = vadd.f32 0.0, %v590
        %v592 = vpop.f32.mrb[0].mxu0
        %593 = vmatprep.mubr.f32.mxu0 0.0
        %594 = vmatmul.mubr.f32.gmra.mrb[0].mxu0 %v416
        %v595 = vpop.f32.mrb[0].mxu0
        %v596 = vadd.f32 0.0, %v595
        %v597 = vpop.f32.mrb[0].mxu0
        %598 = vmatprep.mubr.f32.mxu0 0.0
        %599 = vmatmul.mubr.f32.gmra.mrb[0].mxu0 %v419
        %v600 = vpop.f32.mrb[0].mxu0
        %v601 = vadd.f32 0.0, %v600
        %v602 = vpop.f32.mrb[0].mxu0
        %603 = vmatprep.mubr.f32.mxu0 0.0
        %604 = vmatmul.mubr.f32.gmra.mrb[0].mxu0 %v422
        %v605 = vpop.f32.mrb[0].mxu0
        %v606 = vadd.f32 0.0, %v605
        %v607 = vpop.f32.mrb[0].mxu0
        %608 = vmatprep.mubr.f32.mxu0 0.0
        %609 = vmatmul.mubr.f32.gmra.mrb[0].mxu0 %v425
        %v610 = vpop.f32.mrb[0].mxu0
        %v611 = vadd.f32 0.0, %v610
        %v612 = vpop.f32.mrb[0].mxu0
        %613 = vmatprep.mubr.f32.mxu0 0.0
        %614 = vmatmul.mubr.f32.gmra.mrb[0].mxu0 %v428
        %v615 = vpop.f32.mrb[0].mxu0
        %v616 = vadd.f32 0.0, %v615
        %v617 = vpop.f32.mrb[0].mxu0
        %618 = vmatprep.mubr.f32.mxu0 0.0
        %619 = vmatmul.mubr.f32.gmra.mrb[0].mxu0 %v431
        %v620 = vpop.f32.mrb[0].mxu0
        %v621 = vadd.f32 0.0, %v620
        %v622 = vpop.f32.mrb[0].mxu0
        %623 = vmatprep.mubr.f32.mxu0 0.0
        %624 = vmatmul.mubr.f32.gmra.mrb[0].mxu0 %v434
        %v625 = vpop.f32.mrb[0].mxu0
        %v626 = vadd.f32 0.0, %v625
        %v627 = vpop.f32.mrb[0].mxu0
        %628 = vmatprep.mubr.f32.mxu0 0.0
        %629 = vmatmul.mubr.f32.gmra.mrb[0].mxu0 %v437
        %v630 = vpop.f32.mrb[0].mxu0
        %v631 = vadd.f32 0.0, %v630
        %v632 = vpop.f32.mrb[0].mxu0
        %633 = vmatprep.mubr.f32.mxu0 0.0
        %634 = vmatmul.mubr.f32.gmra.mrb[0].mxu0 %v440
        %v635 = vpop.f32.mrb[0].mxu0
        %v636 = vadd.f32 0.0, %v635
        %v637 = vpop.f32.mrb[0].mxu0
        %638 = vmatprep.mubr.f32.mxu0 0.0
        %639 = vmatmul.mubr.f32.gmra.mrb[0].mxu0 %v443
        %v640 = vpop.f32.mrb[0].mxu0
        %v641 = vadd.f32 0.0, %v640
        %v642 = vpop.f32.mrb[0].mxu0
        %643 = vmatprep.mubr.f32.mxu0 0.0
        %644 = vmatmul.mubr.f32.gmra.mrb[0].mxu0 %v446
        %v645 = vpop.f32.mrb[0].mxu0
        %v646 = vadd.f32 0.0, %v645
        %v647 = vpop.f32.mrb[0].mxu0
        %648 = vmatprep.mubr.f32.mxu0 0.0
        %649 = vmatmul.mubr.f32.gmra.mrb[0].mxu0 %v449
        %v650 = vpop.f32.mrb[0].mxu0
        %v651 = vadd.f32 0.0, %v650
        %v652 = vpop.f32.mrb[0].mxu0
        %653 = vmatprep.mubr.f32.mxu0 0.0
        %654 = vmatmul.mubr.f32.gmra.mrb[0].mxu0 %v452
        %v655 = vpop.f32.mrb[0].mxu0
        %v656 = vadd.f32 0.0, %v655
        %v657 = vpop.f32.mrb[0].mxu0
        %658 = vmatprep.mubr.f32.mxu0 0.0
        %659 = vmatmul.mubr.f32.gmra.mrb[0].mxu0 %v455
        %v660 = vpop.f32.mrb[0].mxu0
        %v661 = vadd.f32 0.0, %v660
        %v662 = vpop.f32.mrb[0].mxu0
        %663 = vmatprep.mubr.f32.mxu0 0.0
        %664 = vmatmul.mubr.f32.gmra.mrb[0].mxu0 %v458
        %v665 = vpop.f32.mrb[0].mxu0
        %v666 = vadd.f32 0.0, %v665
        %v667 = vpop.f32.mrb[0].mxu0
        %668 = vmatprep.mubr.f32.mxu0 0.0
        %669 = vmatmul.mubr.f32.gmra.mrb[0].mxu0 %v461
        %v670 = vpop.f32.mrb[0].mxu0
        %v671 = vadd.f32 0.0, %v670
        %v672 = vpop.f32.mrb[0].mxu0
        %673 = vmatprep.mubr.f32.mxu0 0.0
        %674 = vmatmul.mubr.f32.gmra.mrb[0].mxu0 %v464
        %v675 = vpop.f32.mrb[0].mxu0
        %v676 = vadd.f32 0.0, %v675
        %v677 = vpop.f32.mrb[0].mxu0
        %678 = vmatprep.mubr.f32.mxu0 0.0
        %679 = vmatmul.mubr.f32.gmra.mrb[0].mxu0 %v467
        %v680 = vpop.f32.mrb[0].mxu0
        %v681 = vadd.f32 0.0, %v680
        %v682 = vpop.f32.mrb[0].mxu0
        %683 = vmatprep.mubr.f32.mxu0 0.0
        %684 = vmatmul.mubr.f32.gmra.mrb[0].mxu0 %v470
        %v685 = vpop.f32.mrb[0].mxu0
        %v686 = vadd.f32 0.0, %v685
        %v687 = vpop.f32.mrb[0].mxu0
        %688 = vmatprep.mubr.f32.mxu0 0.0
        %689 = vmatmul.mubr.f32.gmra.mrb[0].mxu0 %v473
        %v690 = vpop.f32.mrb[0].mxu0
        %v691 = vadd.f32 0.0, %v690
        %v692 = vpop.f32.mrb[0].mxu0
        %693 = vmatprep.mubr.f32.mxu0 0.0
        %694 = vmatmul.mubr.f32.gmra.mrb[0].mxu0 %v476
        %v695 = vpop.f32.mrb[0].mxu0
        %v696 = vadd.f32 0.0, %v695
        %v697 = vpop.f32.mrb[0].mxu0
        %698 = vmatprep.mubr.f32.mxu0 0.0
        %699 = vmatmul.mubr.f32.gmra.mrb[0].mxu0 %v479
        %v700 = vpop.f32.mrb[0].mxu0
        %v701 = vadd.f32 0.0, %v700
        %v702 = vpop.f32.mrb[0].mxu0
        %703 = vmatprep.mubr.f32.mxu0 0.0
        %704 = vmatmul.mubr.f32.gmra.mrb[0].mxu0 %v482
        %v705 = vpop.f32.mrb[0].mxu0
        %v706 = vadd.f32 0.0, %v705
        %v707 = vpop.f32.mrb[0].mxu0
        %708 = vmatprep.mubr.f32.mxu0 0.0
        %709 = vmatmul.mubr.f32.gmra.mrb[0].mxu0 %v485
        %v710 = vpop.f32.mrb[0].mxu0
        %v711 = vadd.f32 0.0, %v710
        %v712 = vpop.f32.mrb[0].mxu0
        %713 = vmatprep.mubr.f32.mxu0 0.0
        %714 = vmatmul.mubr.f32.gmra.mrb[0].mxu0 %v488
        %v715 = vpop.f32.mrb[0].mxu0
        %v716 = vadd.f32 0.0, %v715
        %v717 = vpop.f32.mrb[0].mxu0
        %718 = vdwg.mxu0
        %719 = vmatprep.subr.mxu0 0.0
        %720 = vmatpush1.msra.mxu0 %v561
        %721 = vmatprep.subr.mxu0 0.0
        %722 = vmatpush1.msra.mxu0 %v566
        %723 = vmatprep.subr.mxu0 0.0
        %724 = vmatpush1.msra.mxu0 %v571
        %725 = vmatprep.subr.mxu0 0.0
        %726 = vmatpush1.msra.mxu0 %v576
        %727 = vmatprep.subr.mxu0 0.0
        %728 = vmatpush1.msra.mxu0 %v581
        %729 = vmatprep.subr.mxu0 0.0
        %730 = vmatpush1.msra.mxu0 %v586
        %731 = vmatprep.subr.mxu0 0.0
        %732 = vmatpush1.msra.mxu0 %v591
        %733 = vmatprep.subr.mxu0 0.0
        %734 = vmatpush1.msra.mxu0 %v596
        %735 = vmatprep.subr.mxu0 0.0
        %736 = vmatpush1.msra.mxu0 %v601
        %737 = vmatprep.subr.mxu0 0.0
        %738 = vmatpush1.msra.mxu0 %v606
        %739 = vmatprep.subr.mxu0 0.0
        %740 = vmatpush1.msra.mxu0 %v611
        %741 = vmatprep.subr.mxu0 0.0
        %742 = vmatpush1.msra.mxu0 %v616
        %743 = vmatprep.subr.mxu0 0.0
        %744 = vmatpush1.msra.mxu0 %v621
        %745 = vmatprep.subr.mxu0 0.0
        %746 = vmatpush1.msra.mxu0 %v626
        %747 = vmatprep.subr.mxu0 0.0
        %748 = vmatpush1.msra.mxu0 %v631
        %749 = vmatprep.subr.mxu0 0.0
        %750 = vmatpush1.msra.mxu0 %v636
        %751 = vmatprep.subr.mxu0 0.0
        %752 = vmatpush1.msra.mxu0 %v641
        %753 = vmatprep.subr.mxu0 0.0
        %754 = vmatpush1.msra.mxu0 %v646
        %755 = vmatprep.subr.mxu0 0.0
        %756 = vmatpush1.msra.mxu0 %v651
        %757 = vmatprep.subr.mxu0 0.0
        %758 = vmatpush1.msra.mxu0 %v656
        %759 = vmatprep.subr.mxu0 0.0
        %760 = vmatpush1.msra.mxu0 %v661
        %761 = vmatprep.subr.mxu0 0.0
        %762 = vmatpush1.msra.mxu0 %v666
        %763 = vmatprep.subr.mxu0 0.0
        %764 = vmatpush1.msra.mxu0 %v671
        %765 = vmatprep.subr.mxu0 0.0
        %766 = vmatpush1.msra.mxu0 %v676
        %767 = vmatprep.subr.mxu0 0.0
        %768 = vmatpush1.msra.mxu0 %v681
        %769 = vmatprep.subr.mxu0 0.0
        %770 = vmatpush1.msra.mxu0 %v686
        %771 = vmatprep.subr.mxu0 0.0
        %772 = vmatpush1.msra.mxu0 %v691
        %773 = vmatprep.subr.mxu0 0.0
        %774 = vmatpush1.msra.mxu0 %v696
        %775 = vmatprep.subr.mxu0 0.0
        %776 = vmatpush1.msra.mxu0 %v701
        %777 = vmatprep.subr.mxu0 0.0
        %778 = vmatpush1.msra.mxu0 %v706
        %779 = vmatprep.subr.mxu0 0.0
        %780 = vmatpush1.msra.mxu0 %v711
        %781 = vmatprep.subr.mxu0 0.0
        %782 = vmatpush1.msra.mxu0 %v716
        %783 = vmatprep.mubr.f32.mxu0 1.0
        %784 = vmatmul.mubr.f32.gmra.mrb[0].mxu0 1.0
        %v785 = vpop.f32.mrb[0].mxu0
        %v786 = vadd.f32 0.0, %v785
        %v787 = vpop.f32.mrb[0].mxu0
        %788 = vdwg.mxu0
        %v789 = vmul.f32 %v561, %v561
        %v790 = vmul.f32 %v566, %v566
        %v791 = vmul.f32 %v571, %v571
        %v792 = vmul.f32 %v576, %v576
        %v793 = vmul.f32 %v581, %v581
        %v794 = vmul.f32 %v586, %v586
        %v795 = vmul.f32 %v591, %v591
        %v796 = vmul.f32 %v596, %v596
        %v797 = vmul.f32 %v601, %v601
        %v798 = vmul.f32 %v606, %v606
        %v799 = vmul.f32 %v611, %v611
        %v800 = vmul.f32 %v616, %v616
        %v801 = vmul.f32 %v621, %v621
        %v802 = vmul.f32 %v626, %v626
        %v803 = vmul.f32 %v631, %v631
        %v804 = vmul.f32 %v636, %v636
        %v805 = vmul.f32 %v641, %v641
        %v806 = vmul.f32 %v646, %v646
        %v807 = vmul.f32 %v651, %v651
        %v808 = vmul.f32 %v656, %v656
        %v809 = vmul.f32 %v661, %v661
        %v810 = vmul.f32 %v666, %v666
        %v811 = vmul.f32 %v671, %v671
        %v812 = vmul.f32 %v676, %v676
        %v813 = vmul.f32 %v681, %v681
        %v814 = vmul.f32 %v686, %v686
        %v815 = vmul.f32 %v691, %v691
        %v816 = vmul.f32 %v696, %v696
        %v817 = vmul.f32 %v701, %v701
        %v818 = vmul.f32 %v706, %v706
        %v819 = vmul.f32 %v711, %v711
        %v820 = vmul.f32 %v716, %v716
        %v821 = vld [vmem:[%s340] sm:$0x1]
        %v822 = vmul.f32 %v821, 256.0
        %v823 = vadd.f32 %v786, %v822
        %v824 = vmul.f32 %v821, 2.0
        %v825 = vmul.f32 %v824, %v786
        %826 = vmatprep.subr.mxu0 0.0
        %827 = vmatpush1.msra.mxu0 %v789
        %828 = vmatprep.subr.mxu0 0.0
        %829 = vmatpush1.msra.mxu0 %v790
        %830 = vmatprep.subr.mxu0 0.0
        %831 = vmatpush1.msra.mxu0 %v791
        %832 = vmatprep.subr.mxu0 0.0
        %833 = vmatpush1.msra.mxu0 %v792
        %834 = vmatprep.subr.mxu0 0.0
        %835 = vmatpush1.msra.mxu0 %v793
        %836 = vmatprep.subr.mxu0 0.0
        %837 = vmatpush1.msra.mxu0 %v794
        %838 = vmatprep.subr.mxu0 0.0
        %839 = vmatpush1.msra.mxu0 %v795
        %840 = vmatprep.subr.mxu0 0.0
        %841 = vmatpush1.msra.mxu0 %v796
        %842 = vmatprep.subr.mxu0 0.0
        %843 = vmatpush1.msra.mxu0 %v797
        %844 = vmatprep.subr.mxu0 0.0
        %845 = vmatpush1.msra.mxu0 %v798
        %846 = vmatprep.subr.mxu0 0.0
        %847 = vmatpush1.msra.mxu0 %v799
        %848 = vmatprep.subr.mxu0 0.0
        %849 = vmatpush1.msra.mxu0 %v800
        %850 = vmatprep.subr.mxu0 0.0
        %851 = vmatpush1.msra.mxu0 %v801
        %852 = vmatprep.subr.mxu0 0.0
        %853 = vmatpush1.msra.mxu0 %v802
        %854 = vmatprep.subr.mxu0 0.0
        %855 = vmatpush1.msra.mxu0 %v803
        %856 = vmatprep.subr.mxu0 0.0
        %857 = vmatpush1.msra.mxu0 %v804
        %858 = vmatprep.subr.mxu0 0.0
        %859 = vmatpush1.msra.mxu0 %v805
        %860 = vmatprep.subr.mxu0 0.0
        %861 = vmatpush1.msra.mxu0 %v806
        %862 = vmatprep.subr.mxu0 0.0
        %863 = vmatpush1.msra.mxu0 %v807
        %864 = vmatprep.subr.mxu0 0.0
        %865 = vmatpush1.msra.mxu0 %v808
        %866 = vmatprep.subr.mxu0 0.0
        %867 = vmatpush1.msra.mxu0 %v809
        %868 = vmatprep.subr.mxu0 0.0
        %869 = vmatpush1.msra.mxu0 %v810
        %870 = vmatprep.subr.mxu0 0.0
        %871 = vmatpush1.msra.mxu0 %v811
        %872 = vmatprep.subr.mxu0 0.0
        %873 = vmatpush1.msra.mxu0 %v812
        %874 = vmatprep.subr.mxu0 0.0
        %875 = vmatpush1.msra.mxu0 %v813
        %876 = vmatprep.subr.mxu0 0.0
        %877 = vmatpush1.msra.mxu0 %v814
        %878 = vmatprep.subr.mxu0 0.0
        %879 = vmatpush1.msra.mxu0 %v815
        %880 = vmatprep.subr.mxu0 0.0
        %881 = vmatpush1.msra.mxu0 %v816
        %882 = vmatprep.subr.mxu0 0.0
        %883 = vmatpush1.msra.mxu0 %v817
        %884 = vmatprep.subr.mxu0 0.0
        %885 = vmatpush1.msra.mxu0 %v818
        %886 = vmatprep.subr.mxu0 0.0
        %887 = vmatpush1.msra.mxu0 %v819
        %888 = vmatprep.subr.mxu0 0.0
        %889 = vmatpush1.msra.mxu0 %v820
        %890 = vmatprep.mubr.f32.mxu0 1.0
        %891 = vmatmul.mubr.f32.gmra.mrb[0].mxu0 1.0
        %v892 = vpop.f32.mrb[0].mxu0
        %v893 = vadd.f32 %v825, %v892
        %v894 = vpop.f32.mrb[0].mxu0
        %895 = vdwg.mxu0
        %v896 = vmul.f32 %v821, %v821
        %v897 = vmul.f32 %v896, 256.0
        %v898 = vadd.f32 %v893, %v897
        %v900 = vrot.slane %v898, 7
        %vm902 = vcmask 1040384
        %v903 = vsel %vm902, %v823, %v900
        %v904 = vld [vmem:[%s354] sm:$0xff]
        %v905 = vld [vmem:[%s354 + $0x8] sm:$0xff]
        %v906 = vld [vmem:[%s354 + $0x10] sm:$0xff]
        %v907 = vld [vmem:[%s354 + $0x18] sm:$0xff]
        %v908 = vld [vmem:[%s354 + $0x20] sm:$0xff]
        %v909 = vld [vmem:[%s354 + $0x28] sm:$0xff]
        %v910 = vld [vmem:[%s354 + $0x30] sm:$0xff]
        %v911 = vld [vmem:[%s354 + $0x38] sm:$0xff]
        %v912 = vld [vmem:[%s354 + $0x40] sm:$0xff]
        %v913 = vld [vmem:[%s354 + $0x48] sm:$0xff]
        %v914 = vld [vmem:[%s354 + $0x50] sm:$0xff]
        %v915 = vld [vmem:[%s354 + $0x58] sm:$0xff]
        %v916 = vld [vmem:[%s354 + $0x60] sm:$0xff]
        %v917 = vld [vmem:[%s354 + $0x68] sm:$0xff]
        %v918 = vld [vmem:[%s354 + $0x70] sm:$0xff]
        %v919 = vld [vmem:[%s354 + $0x78] sm:$0xff]
        %920 = vmatprep.subr.mxu0 0.0
        %921 = vmatpush1.msra.mxu0 %v904
        %922 = vmatprep.subr.mxu0 0.0
        %923 = vmatpush1.msra.mxu0 %v905
        %924 = vmatprep.subr.mxu0 0.0
        %925 = vmatpush1.msra.mxu0 %v906
        %926 = vmatprep.subr.mxu0 0.0
        %927 = vmatpush1.msra.mxu0 %v907
        %928 = vmatprep.subr.mxu0 0.0
        %929 = vmatpush1.msra.mxu0 %v908
        %930 = vmatprep.subr.mxu0 0.0
        %931 = vmatpush1.msra.mxu0 %v909
        %932 = vmatprep.subr.mxu0 0.0
        %933 = vmatpush1.msra.mxu0 %v910
        %934 = vmatprep.subr.mxu0 0.0
        %935 = vmatpush1.msra.mxu0 %v911
        %936 = vmatprep.subr.mxu0 0.0
        %937 = vmatpush1.msra.mxu0 %v912
        %938 = vmatprep.subr.mxu0 0.0
        %939 = vmatpush1.msra.mxu0 %v913
        %940 = vmatprep.subr.mxu0 0.0
        %941 = vmatpush1.msra.mxu0 %v914
        %942 = vmatprep.subr.mxu0 0.0
        %943 = vmatpush1.msra.mxu0 %v915
        %944 = vmatprep.subr.mxu0 0.0
        %945 = vmatpush1.msra.mxu0 %v916
        %946 = vmatprep.subr.mxu0 0.0
        %947 = vmatpush1.msra.mxu0 %v917
        %948 = vmatprep.subr.mxu0 0.0
        %949 = vmatpush1.msra.mxu0 %v918
        %950 = vmatprep.subr.mxu0 0.0
        %951 = vmatpush1.msra.mxu0 %v919
        %952 = vmatprep.subr.mxu0 0.0
        %953 = vmatpush1.msra.mxu0 0.0
        %954 = vmatprep.subr.mxu0 0.0
        %955 = vmatpush1.msra.mxu0 0.0
        %956 = vmatprep.subr.mxu0 0.0
        %957 = vmatpush1.msra.mxu0 0.0
        %958 = vmatprep.subr.mxu0 0.0
        %959 = vmatpush1.msra.mxu0 0.0
        %960 = vmatprep.subr.mxu0 0.0
        %961 = vmatpush1.msra.mxu0 0.0
        %962 = vmatprep.subr.mxu0 0.0
        %963 = vmatpush1.msra.mxu0 0.0
        %964 = vmatprep.subr.mxu0 0.0
        %965 = vmatpush1.msra.mxu0 0.0
        %966 = vmatprep.subr.mxu0 0.0
        %967 = vmatpush1.msra.mxu0 0.0
        %968 = vmatprep.subr.mxu0 0.0
        %969 = vmatpush1.msra.mxu0 0.0
        %970 = vmatprep.subr.mxu0 0.0
        %971 = vmatpush1.msra.mxu0 0.0
        %972 = vmatprep.subr.mxu0 0.0
        %973 = vmatpush1.msra.mxu0 0.0
        %974 = vmatprep.subr.mxu0 0.0
        %975 = vmatpush1.msra.mxu0 0.0
        %976 = vmatprep.subr.mxu0 0.0
        %977 = vmatpush1.msra.mxu0 0.0
        %978 = vmatprep.subr.mxu0 0.0
        %979 = vmatpush1.msra.mxu0 0.0
        %980 = vmatprep.subr.mxu0 0.0
        %981 = vmatpush1.msra.mxu0 0.0
        %982 = vmatprep.subr.mxu0 0.0
        %983 = vmatpush1.msra.mxu0 0.0
        %984 = vmatprep.mubr.f32.mxu0 0.0
        %985 = vmatmul.mubr.f32.gmra.mrb[0].mxu0 %v903
        %v986 = vpop.f32.mrb[0].mxu0
        %v987 = vadd.f32 0.0, %v986
        %v988 = vpop.f32.mrb[0].mxu0
        %989 = vdwg.mxu0
        %v990 = vmul.f32 %v987, 0.0009765625
        %v991 = vmul.f32 %v990, %v990
        %v993 = vrot.slane %v991, 7
        %v995 = vsub.f32 %v990, %v993
        %v996 = vmax.f32 %v995, 0.0
        %v997 = vadd.f32 %v996, 1e-05
        %v998 = vrsqrt.pop %v997
        %v999 = vld [vmem:[%s343] sm:$0x1]
        %v1001 = vlaneseq
        %v1002 = vshrl.u32 %v1001, 7
        %v1003 = vsub.s32 0, %v1002
        %v1004 = vrot.slane %v999, %v1003
        %v1006 = vmul.f32 %v998, %v1004
        %v1007 = vld [vmem:[%s346] sm:$0x1]
        %v1008 = vsub.f32 %v821, %v990
        %v1011 = vunpack.c.l.s4 1966171168
        %v1012 = vunpack.c.0.s8 %v1011
        %v1013 = vlaneseq
        %v1014 = vshrl.u32 %v1013, 7
        %v1015 = vsub.s32 %v1012, %v1014
        %v1016 = vrot.slane %v1006, %v1015
        %v1017 = vcombine.high %v1016, %v1016
        %v1019 = vunpack.c.l.s4 1966171168
        %v1020 = vunpack.c.0.s8 %v1019
        %v1021 = vlaneseq
        %v1022 = vshrl.u32 %v1021, 7
        %v1023 = vsub.s32 %v1020, %v1022
        %v1024 = vrot.slane %v1017, %v1023
        %v1026 = vmul.f32 %v1008, %v1024
        %v1027 = vadd.f32 %v1007, %v1026
        %v1028 = vlaneseq
        %v1029 = vshrl.u32 %v1028, 7
        %v1030 = vsub.s32 1, %v1029
        %v1031 = vrot.slane %v1006, %v1030
        %v1032 = vmul.f32 %v561, %v1031
        %v1033 = vmul.f32 %v566, %v1031
        %v1034 = vmul.f32 %v571, %v1031
        %v1035 = vmul.f32 %v576, %v1031
        %v1036 = vmul.f32 %v581, %v1031
        %v1037 = vmul.f32 %v586, %v1031
        %v1038 = vmul.f32 %v591, %v1031
        %v1039 = vmul.f32 %v596, %v1031
        %v1040 = vmul.f32 %v601, %v1031
        %v1041 = vmul.f32 %v606, %v1031
        %v1042 = vmul.f32 %v611, %v1031
        %v1043 = vmul.f32 %v616, %v1031
        %v1044 = vmul.f32 %v621, %v1031
        %v1045 = vmul.f32 %v626, %v1031
        %v1046 = vmul.f32 %v631, %v1031
        %v1047 = vmul.f32 %v636, %v1031
        %v1048 = vmul.f32 %v641, %v1031
        %v1049 = vmul.f32 %v646, %v1031
        %v1050 = vmul.f32 %v651, %v1031
        %v1051 = vmul.f32 %v656, %v1031
        %v1052 = vmul.f32 %v661, %v1031
        %v1053 = vmul.f32 %v666, %v1031
        %v1054 = vmul.f32 %v671, %v1031
        %v1055 = vmul.f32 %v676, %v1031
        %v1056 = vmul.f32 %v681, %v1031
        %v1057 = vmul.f32 %v686, %v1031
        %v1058 = vmul.f32 %v691, %v1031
        %v1059 = vmul.f32 %v696, %v1031
        %v1060 = vmul.f32 %v701, %v1031
        %v1061 = vmul.f32 %v706, %v1031
        %v1062 = vmul.f32 %v711, %v1031
        %v1063 = vmul.f32 %v716, %v1031
        %v1065 = vlaneseq
        %v1066 = vshrl.u32 %v1065, 7
        %v1067 = vsub.s32 0, %v1066
        %v1068 = vrot.slane %v1027, %v1067
        %v1070 = vadd.f32 %v1032, %v1068
        %v1071 = vadd.f32 %v1033, %v1068
        %v1072 = vadd.f32 %v1034, %v1068
        %v1073 = vadd.f32 %v1035, %v1068
        %v1074 = vadd.f32 %v1036, %v1068
        %v1075 = vadd.f32 %v1037, %v1068
        %v1076 = vadd.f32 %v1038, %v1068
        %v1077 = vadd.f32 %v1039, %v1068
        %v1078 = vadd.f32 %v1040, %v1068
        %v1079 = vadd.f32 %v1041, %v1068
        %v1080 = vadd.f32 %v1042, %v1068
        %v1081 = vadd.f32 %v1043, %v1068
        %v1082 = vadd.f32 %v1044, %v1068
        %v1083 = vadd.f32 %v1045, %v1068
        %v1084 = vadd.f32 %v1046, %v1068
        %v1085 = vadd.f32 %v1047, %v1068
        %v1086 = vadd.f32 %v1048, %v1068
        %v1087 = vadd.f32 %v1049, %v1068
        %v1088 = vadd.f32 %v1050, %v1068
        %v1089 = vadd.f32 %v1051, %v1068
        %v1090 = vadd.f32 %v1052, %v1068
        %v1091 = vadd.f32 %v1053, %v1068
        %v1092 = vadd.f32 %v1054, %v1068
        %v1093 = vadd.f32 %v1055, %v1068
        %v1094 = vadd.f32 %v1056, %v1068
        %v1095 = vadd.f32 %v1057, %v1068
        %v1096 = vadd.f32 %v1058, %v1068
        %v1097 = vadd.f32 %v1059, %v1068
        %v1098 = vadd.f32 %v1060, %v1068
        %v1099 = vadd.f32 %v1061, %v1068
        %v1100 = vadd.f32 %v1062, %v1068
        %v1101 = vadd.f32 %v1063, %v1068
        %vm1102 = vcmp.gt.f32.partialorder %v1070, 0.0
        %vm1103 = vcmp.gt.f32.partialorder %v1071, 0.0
        %vm1104 = vcmp.gt.f32.partialorder %v1072, 0.0
        %vm1105 = vcmp.gt.f32.partialorder %v1073, 0.0
        %vm1106 = vcmp.gt.f32.partialorder %v1074, 0.0
        %vm1107 = vcmp.gt.f32.partialorder %v1075, 0.0
        %vm1108 = vcmp.gt.f32.partialorder %v1076, 0.0
        %vm1109 = vcmp.gt.f32.partialorder %v1077, 0.0
        %vm1110 = vcmp.gt.f32.partialorder %v1078, 0.0
        %vm1111 = vcmp.gt.f32.partialorder %v1079, 0.0
        %vm1112 = vcmp.gt.f32.partialorder %v1080, 0.0
        %vm1113 = vcmp.gt.f32.partialorder %v1081, 0.0
        %vm1114 = vcmp.gt.f32.partialorder %v1082, 0.0
        %vm1115 = vcmp.gt.f32.partialorder %v1083, 0.0
        %vm1116 = vcmp.gt.f32.partialorder %v1084, 0.0
        %vm1117 = vcmp.gt.f32.partialorder %v1085, 0.0
        %vm1118 = vcmp.gt.f32.partialorder %v1086, 0.0
        %vm1119 = vcmp.gt.f32.partialorder %v1087, 0.0
        %vm1120 = vcmp.gt.f32.partialorder %v1088, 0.0
        %vm1121 = vcmp.gt.f32.partialorder %v1089, 0.0
        %vm1122 = vcmp.gt.f32.partialorder %v1090, 0.0
        %vm1123 = vcmp.gt.f32.partialorder %v1091, 0.0
        %vm1124 = vcmp.gt.f32.partialorder %v1092, 0.0
        %vm1125 = vcmp.gt.f32.partialorder %v1093, 0.0
        %vm1126 = vcmp.gt.f32.partialorder %v1094, 0.0
        %vm1127 = vcmp.gt.f32.partialorder %v1095, 0.0
        %vm1128 = vcmp.gt.f32.partialorder %v1096, 0.0
        %vm1129 = vcmp.gt.f32.partialorder %v1097, 0.0
        %vm1130 = vcmp.gt.f32.partialorder %v1098, 0.0
        %vm1131 = vcmp.gt.f32.partialorder %v1099, 0.0
        %vm1132 = vcmp.gt.f32.partialorder %v1100, 0.0
        %vm1133 = vcmp.gt.f32.partialorder %v1101, 0.0
        %v1134 = vmin.f32 %v1070, 0.0
        %v1135 = vmin.f32 %v1071, 0.0
        %v1136 = vmin.f32 %v1072, 0.0
        %v1137 = vmin.f32 %v1073, 0.0
        %v1138 = vmin.f32 %v1074, 0.0
        %v1139 = vmin.f32 %v1075, 0.0
        %v1140 = vmin.f32 %v1076, 0.0
        %v1141 = vmin.f32 %v1077, 0.0
        %v1142 = vmin.f32 %v1078, 0.0
        %v1143 = vmin.f32 %v1079, 0.0
        %v1144 = vmin.f32 %v1080, 0.0
        %v1145 = vmin.f32 %v1081, 0.0
        %v1146 = vmin.f32 %v1082, 0.0
        %v1147 = vmin.f32 %v1083, 0.0
        %v1148 = vmin.f32 %v1084, 0.0
        %v1149 = vmin.f32 %v1085, 0.0
        %v1150 = vmin.f32 %v1086, 0.0
        %v1151 = vmin.f32 %v1087, 0.0
        %v1152 = vmin.f32 %v1088, 0.0
        %v1153 = vmin.f32 %v1089, 0.0
        %v1154 = vmin.f32 %v1090, 0.0
        %v1155 = vmin.f32 %v1091, 0.0
        %v1156 = vmin.f32 %v1092, 0.0
        %v1157 = vmin.f32 %v1093, 0.0
        %v1158 = vmin.f32 %v1094, 0.0
        %v1159 = vmin.f32 %v1095, 0.0
        %v1160 = vmin.f32 %v1096, 0.0
        %v1161 = vmin.f32 %v1097, 0.0
        %v1162 = vmin.f32 %v1098, 0.0
        %v1163 = vmin.f32 %v1099, 0.0
        %v1164 = vmin.f32 %v1100, 0.0
        %v1165 = vmin.f32 %v1101, 0.0
        %v1166 = vmul.f32 %v1134, 1.442695
        %v1167 = vpow.pop %v1166
        %v1168 = vmul.f32 %v1135, 1.442695
        %v1169 = vpow.pop %v1168
        %v1170 = vmul.f32 %v1136, 1.442695
        %v1171 = vpow.pop %v1170
        %v1172 = vmul.f32 %v1137, 1.442695
        %v1173 = vpow.pop %v1172
        %v1174 = vmul.f32 %v1138, 1.442695
        %v1175 = vpow.pop %v1174
        %v1176 = vmul.f32 %v1139, 1.442695
        %v1177 = vpow.pop %v1176
        %v1178 = vmul.f32 %v1140, 1.442695
        %v1179 = vpow.pop %v1178
        %v1180 = vmul.f32 %v1141, 1.442695
        %v1181 = vpow.pop %v1180
        %v1182 = vmul.f32 %v1142, 1.442695
        %v1183 = vpow.pop %v1182
        %v1184 = vmul.f32 %v1143, 1.442695
        %v1185 = vpow.pop %v1184
        %v1186 = vmul.f32 %v1144, 1.442695
        %v1187 = vpow.pop %v1186
        %v1188 = vmul.f32 %v1145, 1.442695
        %v1189 = vpow.pop %v1188
        %v1190 = vmul.f32 %v1146, 1.442695
        %v1191 = vpow.pop %v1190
        %v1192 = vmul.f32 %v1147, 1.442695
        %v1193 = vpow.pop %v1192
        %v1194 = vmul.f32 %v1148, 1.442695
        %v1195 = vpow.pop %v1194
        %v1196 = vmul.f32 %v1149, 1.442695
        %v1197 = vpow.pop %v1196
        %v1198 = vmul.f32 %v1150, 1.442695
        %v1199 = vpow.pop %v1198
        %v1200 = vmul.f32 %v1151, 1.442695
        %v1201 = vpow.pop %v1200
        %v1202 = vmul.f32 %v1152, 1.442695
        %v1203 = vpow.pop %v1202
        %v1204 = vmul.f32 %v1153, 1.442695
        %v1205 = vpow.pop %v1204
        %v1206 = vmul.f32 %v1154, 1.442695
        %v1207 = vpow.pop %v1206
        %v1208 = vmul.f32 %v1155, 1.442695
        %v1209 = vpow.pop %v1208
        %v1210 = vmul.f32 %v1156, 1.442695
        %v1211 = vpow.pop %v1210
        %v1212 = vmul.f32 %v1157, 1.442695
        %v1213 = vpow.pop %v1212
        %v1214 = vmul.f32 %v1158, 1.442695
        %v1215 = vpow.pop %v1214
        %v1216 = vmul.f32 %v1159, 1.442695
        %v1217 = vpow.pop %v1216
        %v1218 = vmul.f32 %v1160, 1.442695
        %v1219 = vpow.pop %v1218
        %v1220 = vmul.f32 %v1161, 1.442695
        %v1221 = vpow.pop %v1220
        %v1222 = vmul.f32 %v1162, 1.442695
        %v1223 = vpow.pop %v1222
        %v1224 = vmul.f32 %v1163, 1.442695
        %v1225 = vpow.pop %v1224
        %v1226 = vmul.f32 %v1164, 1.442695
        %v1227 = vpow.pop %v1226
        %v1228 = vmul.f32 %v1165, 1.442695
        %v1229 = vpow.pop %v1228
        %v1230 = vsub.f32 %v1167, 1.0
        %v1231 = vsub.f32 %v1169, 1.0
        %v1232 = vsub.f32 %v1171, 1.0
        %v1233 = vsub.f32 %v1173, 1.0
        %v1234 = vsub.f32 %v1175, 1.0
        %v1235 = vsub.f32 %v1177, 1.0
        %v1236 = vsub.f32 %v1179, 1.0
        %v1237 = vsub.f32 %v1181, 1.0
        %v1238 = vsub.f32 %v1183, 1.0
        %v1239 = vsub.f32 %v1185, 1.0
        %v1240 = vsub.f32 %v1187, 1.0
        %v1241 = vsub.f32 %v1189, 1.0
        %v1242 = vsub.f32 %v1191, 1.0
        %v1243 = vsub.f32 %v1193, 1.0
        %v1244 = vsub.f32 %v1195, 1.0
        %v1245 = vsub.f32 %v1197, 1.0
        %v1246 = vsub.f32 %v1199, 1.0
        %v1247 = vsub.f32 %v1201, 1.0
        %v1248 = vsub.f32 %v1203, 1.0
        %v1249 = vsub.f32 %v1205, 1.0
        %v1250 = vsub.f32 %v1207, 1.0
        %v1251 = vsub.f32 %v1209, 1.0
        %v1252 = vsub.f32 %v1211, 1.0
        %v1253 = vsub.f32 %v1213, 1.0
        %v1254 = vsub.f32 %v1215, 1.0
        %v1255 = vsub.f32 %v1217, 1.0
        %v1256 = vsub.f32 %v1219, 1.0
        %v1257 = vsub.f32 %v1221, 1.0
        %v1258 = vsub.f32 %v1223, 1.0
        %v1259 = vsub.f32 %v1225, 1.0
        %v1260 = vsub.f32 %v1227, 1.0
        %v1261 = vsub.f32 %v1229, 1.0
        %v1262 = vsel %vm1102, %v1070, %v1230
        %v1263 = vsel %vm1103, %v1071, %v1231
        %v1264 = vsel %vm1104, %v1072, %v1232
        %v1265 = vsel %vm1105, %v1073, %v1233
        %v1266 = vsel %vm1106, %v1074, %v1234
        %v1267 = vsel %vm1107, %v1075, %v1235
        %v1268 = vsel %vm1108, %v1076, %v1236
        %v1269 = vsel %vm1109, %v1077, %v1237
        %v1270 = vsel %vm1110, %v1078, %v1238
        %v1271 = vsel %vm1111, %v1079, %v1239
        %v1272 = vsel %vm1112, %v1080, %v1240
        %v1273 = vsel %vm1113, %v1081, %v1241
        %v1274 = vsel %vm1114, %v1082, %v1242
        %v1275 = vsel %vm1115, %v1083, %v1243
        %v1276 = vsel %vm1116, %v1084, %v1244
        %v1277 = vsel %vm1117, %v1085, %v1245
        %v1278 = vsel %vm1118, %v1086, %v1246
        %v1279 = vsel %vm1119, %v1087, %v1247
        %v1280 = vsel %vm1120, %v1088, %v1248
        %v1281 = vsel %vm1121, %v1089, %v1249
        %v1282 = vsel %vm1122, %v1090, %v1250
        %v1283 = vsel %vm1123, %v1091, %v1251
        %v1284 = vsel %vm1124, %v1092, %v1252
        %v1285 = vsel %vm1125, %v1093, %v1253
        %v1286 = vsel %vm1126, %v1094, %v1254
        %v1287 = vsel %vm1127, %v1095, %v1255
        %v1288 = vsel %vm1128, %v1096, %v1256
        %v1289 = vsel %vm1129, %v1097, %v1257
        %v1290 = vsel %vm1130, %v1098, %v1258
        %v1291 = vsel %vm1131, %v1099, %v1259
        %v1292 = vsel %vm1132, %v1100, %v1260
        %v1293 = vsel %vm1133, %v1101, %v1261
        %1294 = vst [vmem:[%s328] sm:$0xff] %v1262
        %1295 = vst [vmem:[%s328 + $0x8] sm:$0xff] %v1263
        %1296 = vst [vmem:[%s328 + $0x10] sm:$0xff] %v1264
        %1297 = vst [vmem:[%s328 + $0x18] sm:$0xff] %v1265
        %1298 = vst [vmem:[%s328 + $0x20] sm:$0xff] %v1266
        %1299 = vst [vmem:[%s328 + $0x28] sm:$0xff] %v1267
        %1300 = vst [vmem:[%s328 + $0x30] sm:$0xff] %v1268
        %1301 = vst [vmem:[%s328 + $0x38] sm:$0xff] %v1269
        %1302 = vst [vmem:[%s328 + $0x40] sm:$0xff] %v1270
        %1303 = vst [vmem:[%s328 + $0x48] sm:$0xff] %v1271
        %1304 = vst [vmem:[%s328 + $0x50] sm:$0xff] %v1272
        %1305 = vst [vmem:[%s328 + $0x58] sm:$0xff] %v1273
        %1306 = vst [vmem:[%s328 + $0x60] sm:$0xff] %v1274
        %1307 = vst [vmem:[%s328 + $0x68] sm:$0xff] %v1275
        %1308 = vst [vmem:[%s328 + $0x70] sm:$0xff] %v1276
        %1309 = vst [vmem:[%s328 + $0x78] sm:$0xff] %v1277
        %1310 = vst [vmem:[%s328 + $0x80] sm:$0xff] %v1278
        %1311 = vst [vmem:[%s328 + $0x88] sm:$0xff] %v1279
        %1312 = vst [vmem:[%s328 + $0x90] sm:$0xff] %v1280
        %1313 = vst [vmem:[%s328 + $0x98] sm:$0xff] %v1281
        %1314 = vst [vmem:[%s328 + $0xa0] sm:$0xff] %v1282
        %1315 = vst [vmem:[%s328 + $0xa8] sm:$0xff] %v1283
        %1316 = vst [vmem:[%s328 + $0xb0] sm:$0xff] %v1284
        %1317 = vst [vmem:[%s328 + $0xb8] sm:$0xff] %v1285
        %1318 = vst [vmem:[%s328 + $0xc0] sm:$0xff] %v1286
        %1319 = vst [vmem:[%s328 + $0xc8] sm:$0xff] %v1287
        %1320 = vst [vmem:[%s328 + $0xd0] sm:$0xff] %v1288
        %1321 = vst [vmem:[%s328 + $0xd8] sm:$0xff] %v1289
        %1322 = vst [vmem:[%s328 + $0xe0] sm:$0xff] %v1290
        %1323 = vst [vmem:[%s328 + $0xe8] sm:$0xff] %v1291
        %1324 = vst [vmem:[%s328 + $0xf0] sm:$0xff] %v1292
        %1325 = vst [vmem:[%s328 + $0xf8] sm:$0xff] %v1293
        %s1326 = sand.u32 %s200, 1
        %s1327 = scalar_lea.sflag [#allocation3], %s1326
        %s1328 = sand.u32 %s200, 1
        %s1329 = smul.addr %s1328, 256
        %s1330 = scalar_lea.vmem [#allocation2], %s1329
        // Predicated region
        $region45: #{tpu_custom_call.1} parent=43 // pred_check
          %p1331 = pneg %p210
        $region46: #{tpu_custom_call.1} parent=43 // pred_check_branch
          %1333 = sbr.rel (%p1331) target = $region48
        $region47: #{tpu_custom_call.1} parent=43 // pred_region
          %s1335 = ssub.s32 4096, 4096
          %1336 = vsyncadd %s1327, %s1335
          %s1337 = smul.addr %s24, 32
          %s1338 = sadd.s32 %s25, %s1337
          %s1339 = smul.addr %s1338, 128
          %s1340 = scalar_lea.hbm %s6, %s1339
          %s1341 = sshll.u32 %s1330, 4
          %s1342 = int_to_ptr.vmem [resolvable:$true] %s1341
          %1347 = dma.vmem_to_hbm [thread:$0]  %s1342, 4096, %s1340, %s1327, 128, 128, 8
        $region48: #{tpu_custom_call.1} parent=43 // pred_fallthru
          _
      $region44: #{tpu_custom_call.1} parent=5 // pred_fallthru
        _
      %p1348 = scmp.le.s32.totalorder 2, %s15
      // Predicated region
      $region49: #{tpu_custom_call.1} parent=5 // pred_check
        %p1349 = pneg %p1348
      $region50: #{tpu_custom_call.1} parent=5 // pred_check_branch
        %1351 = sbr.rel (%p1349) target = $region52
      $region51: #{tpu_custom_call.1} parent=5 // pred_region
        %s1352 = ssub.s32 %s15, 2
        // Predicated region
        $region53: #{tpu_custom_call.1} parent=51 // pred_check
          %p1353 = pneg %p216
        $region54: #{tpu_custom_call.1} parent=51 // pred_check_branch
          %1355 = sbr.rel (%p1353) target = $region56
        $region55: #{tpu_custom_call.1} parent=51 // pred_region
          %s1356 = sand.u32 %s201, 1
          %s1357 = scalar_lea.sflag [#allocation3], %s1356
          %s1358 = sand.u32 %s201, 1
          %s1359 = smul.addr %s1358, 256
          %s1360 = scalar_lea.vmem [#allocation2], %s1359
          %1361 = dma.done %s1357, 4096
        $region56: #{tpu_custom_call.1} parent=51 // pred_fallthru
          _
      $region52: #{tpu_custom_call.1} parent=5 // pred_fallthru
        _
    $region6: #{tpu_custom_call.1} parent=1 // loop_footer
      %s19 = sadd.s32 1, %s15
    $region7: #{tpu_custom_call.1} parent=1 // loop_footer_branch
      %14 = sbr.rel target = $region3
    $region8: #{tpu_custom_call.1} parent=1 // loop_exit
      _
    %1362 = vsyncpa [#allocation3], 1
    %s1363 = scalar_lea.sflag [#allocation3], 1
    %1364 = vsyncpa %s1363, 1

</llo_original>
